<compile_context>
chip_gen: v7x
topology: tpu7x:2x2x1
jax: 0.10.0
libtpu: 0.0.40
codegen_flags: <defaults>
</compile_context>

<pallas_src>
import math

import jax
import jax.numpy as jnp
from jax.experimental import pallas as pl
from jax.experimental.pallas import tpu as pltpu

# ----------------------------- hyper-parameters ------------------------------
PATCH = 14                    # dinov2 patch size (vitb14)
EMBED_DIM = 32                # small synthetic embed dim (real dinov2_vitb14: 768)
NUM_HEADS = 2
HEAD_DIM = EMBED_DIM // NUM_HEADS
DEPTH = 2                     # small synthetic depth (real dinov2_vitb14: 12)
MLP_RATIO = 4
HIDDEN = MLP_RATIO * EMBED_DIM
LN_EPS = 1e-6
IMG = 28                      # 28x28 image -> 2x2 = 4 patches
POS_GRID = IMG // PATCH       # pretrained pos-embed grid side == image grid side
NUM_PATCHES = POS_GRID * POS_GRID
TOKENS = NUM_PATCHES + 1      # cls + patches
NVIEWS = 2                    # ground + aerial


def _round_up(x, m):
    return (x + m - 1) // m * m


T_PAD = _round_up(TOKENS, 8)                       # 8  (sublane-aligned token rows)
PD_RAW = 3 * PATCH * PATCH                         # 588
PD_PAD = _round_up(PD_RAW, 128)                    # 640 (lane-aligned patch dim)
VEC_PAD = _round_up(max(EMBED_DIM, 3 * EMBED_DIM, HIDDEN), 128)   # 128

# row indices inside the packed per-block vector array (DEPTH, NVEC, VEC_PAD)
LN1W, LN1B, QKVB, PROJB, LS1, LN2W, LN2B, FC1B, FC2B, LS2 = range(10)
NVEC = 10


# ------------------------------ in-kernel helpers ----------------------------
def _layernorm(v, w, b):
    mu = jnp.mean(v, axis=-1, keepdims=True)
    var = jnp.mean(jnp.square(v - mu), axis=-1, keepdims=True)
    return (v - mu) * jax.lax.rsqrt(var + LN_EPS) * w + b


def _erf(z):
    # Abramowitz & Stegun 7.1.26 polynomial erf (|err| < 1.5e-7).
    a1, a2, a3, a4, a5 = 0.254829592, -0.284496736, 1.421413741, -1.453152027, 1.061405429
    p = 0.3275911
    az = jnp.abs(z)
    t = pl.reciprocal(1.0 + p * az)            # EUP reciprocal (full precision)
    poly = ((((a5 * t + a4) * t + a3) * t + a2) * t + a1) * t
    r = 1.0 - poly * jnp.exp(-az * az)
    return jnp.where(z >= 0, r, -r)


def _gelu_exact(v):
    return 0.5 * v * (1.0 + _erf(v * (1.0 / math.sqrt(2.0))))


# ------------------------------- fused Pallas kernel --------------------------
def encoder_kernel(patches_ref, add_ref, patch_w_ref, vecs_ref,
                   qkvw_ref, projw_ref, fc1w_ref, fc2w_ref,
                   normw_ref, normb_ref, out_ref, x_ref):
    """Grid = (image, depth).  One step = one transformer block on one image."""
    d = pl.program_id(1)
    D = EMBED_DIM

    # Patch embed + cls + pos at depth 0 (result carried in VMEM scratch x_ref).
    @pl.when(d == 0)
    def _init():
        p = patches_ref[0].astype(jnp.bfloat16)                       # (T_PAD, PD_PAD)
        x_ref[...] = (jnp.dot(p, patch_w_ref[...],
                              preferred_element_type=jnp.float32)
                      + add_ref[...])                                  # (T_PAD, D) f32

    x = x_ref[...]                                                     # (T_PAD, D)

    vecs = vecs_ref[0]                                                 # (NVEC, VEC_PAD)
    ln1_w = vecs[LN1W:LN1W + 1, :D];  ln1_b = vecs[LN1B:LN1B + 1, :D]
    qkv_b = vecs[QKVB:QKVB + 1, :3 * D]
    proj_b = vecs[PROJB:PROJB + 1, :D]; ls1 = vecs[LS1:LS1 + 1, :D]
    ln2_w = vecs[LN2W:LN2W + 1, :D];  ln2_b = vecs[LN2B:LN2B + 1, :D]
    fc1_b = vecs[FC1B:FC1B + 1, :HIDDEN]
    fc2_b = vecs[FC2B:FC2B + 1, :D];  ls2 = vecs[LS2:LS2 + 1, :D]

    # ----- attention branch: x = x + ls1 * proj(attn(norm1(x))) -----
    h = _layernorm(x, ln1_w, ln1_b)
    qkv = jnp.dot(h.astype(jnp.bfloat16), qkvw_ref[0],
                  preferred_element_type=jnp.float32) + qkv_b          # (T_PAD, 3D)

    # key-padding mask for the (TOKENS..T_PAD) pad rows, built in-kernel.
    key_ids = jax.lax.broadcasted_iota(jnp.int32, (T_PAD, T_PAD), 1)
    kmask = jnp.where(key_ids < TOKENS, 0.0, -1e30).astype(jnp.float32)

    ctx_heads = []
    for hh in range(NUM_HEADS):                    # static unroll over heads
        q = qkv[:, hh * HEAD_DIM:(hh + 1) * HEAD_DIM]          # 1/sqrt(hd) folded in
        k = qkv[:, D + hh * HEAD_DIM:D + (hh + 1) * HEAD_DIM]
        v = qkv[:, 2 * D + hh * HEAD_DIM:2 * D + (hh + 1) * HEAD_DIM]
        s = jax.lax.dot_general(q.astype(jnp.bfloat16), k.astype(jnp.bfloat16),
                                (((1,), (1,)), ((), ())),
                                preferred_element_type=jnp.float32) + kmask
        s = s - jnp.max(s, axis=-1, keepdims=True)
        p = jnp.exp(s)
        a = p * pl.reciprocal(jnp.sum(p, axis=-1, keepdims=True), approx=True)
        ctx_heads.append(jnp.dot(a.astype(jnp.bfloat16), v.astype(jnp.bfloat16),
                                 preferred_element_type=jnp.float32))  # (T_PAD, hd)
    ctx = jnp.concatenate(ctx_heads, axis=-1)                          # (T_PAD, D)
    attn = jnp.dot(ctx.astype(jnp.bfloat16), projw_ref[0],
                   preferred_element_type=jnp.float32) + proj_b
    x = x + ls1 * attn

    # ----- MLP branch: x = x + ls2 * fc2(gelu(fc1(norm2(x)))) -----
    h2 = _layernorm(x, ln2_w, ln2_b)
    m = jnp.dot(h2.astype(jnp.bfloat16), fc1w_ref[0],
                preferred_element_type=jnp.float32) + fc1_b
    m = _gelu_exact(m)                                                 # exact (erf) GELU
    m = jnp.dot(m.astype(jnp.bfloat16), fc2w_ref[0],
                preferred_element_type=jnp.float32) + fc2_b
    x = x + ls2 * m

    x_ref[...] = x                                                     # carry to next depth

    @pl.when(d == DEPTH - 1)
    def _final():
        out_ref[0] = _layernorm(x, normw_ref[...], normb_ref[...]).astype(out_ref.dtype)


# ------------------------------ pallas_call wrapper ---------------------------
def encode_images(patches, add, params):
    """patches: (NIMG, T_PAD, PD_PAD) f32 -> (NIMG, T_PAD, D) f32 encoded tokens."""
    NIMG = patches.shape[0]
    D = EMBED_DIM
    in_specs = [
        pl.BlockSpec((1, T_PAD, PD_PAD), lambda i, d: (i, 0, 0)),      # patches (per image)
        pl.BlockSpec((T_PAD, D), lambda i, d: (0, 0)),                 # cls/pos/bias add
        pl.BlockSpec((PD_PAD, D), lambda i, d: (0, 0)),                # patch-embed weight
        pl.BlockSpec((1, NVEC, VEC_PAD), lambda i, d: (d, 0, 0)),      # packed block vectors
        pl.BlockSpec((1, D, 3 * D), lambda i, d: (d, 0, 0)),           # qkv weight
        pl.BlockSpec((1, D, D), lambda i, d: (d, 0, 0)),               # proj weight
        pl.BlockSpec((1, D, HIDDEN), lambda i, d: (d, 0, 0)),          # fc1 weight
        pl.BlockSpec((1, HIDDEN, D), lambda i, d: (d, 0, 0)),          # fc2 weight
        pl.BlockSpec((1, D), lambda i, d: (0, 0)),                     # final norm w
        pl.BlockSpec((1, D), lambda i, d: (0, 0)),                     # final norm b
    ]
    return pl.pallas_call(
        encoder_kernel,
        out_shape=jax.ShapeDtypeStruct((NIMG, T_PAD, D), jnp.float32),
        grid=(NIMG, DEPTH),
        in_specs=in_specs,
        out_specs=pl.BlockSpec((1, T_PAD, D), lambda i, d: (i, 0, 0)),
        scratch_shapes=[pltpu.VMEM((T_PAD, D), jnp.float32)],          # x carried over depth
        compiler_params=pltpu.CompilerParams(
            dimension_semantics=("parallel", "arbitrary"),
            vmem_limit_bytes=64 * 1024 * 1024,
        ),
    )(patches, add, params["patch_w"], params["vecs"], params["qkv_w"],
      params["proj_w"], params["fc1_w"], params["fc2_w"],
      params["norm_w"], params["norm_b"])


# ----------------------------------- glue ------------------------------------
def extract_patches(x, patch):
    """NCHW image -> (B, num_patches, C*P*P), same token order as Conv2d+flatten."""
    B, C, H, W = x.shape
    gh, gw = H // patch, W // patch
    p = x.reshape(B, C, gh, patch, gw, patch)
    p = p.transpose(0, 2, 4, 1, 3, 5)            # (B, gh, gw, C, P, P)
    return p.reshape(B, gh * gw, C * patch * patch)


def crossview_forward(params, ground_image, aerial_image):
    """Mirrors CrossviewModel._forward_dinov2: returns (ground_tokens, aerial_tokens)
    with the CLS token stripped (x[:, 1:, :])."""
    B = ground_image.shape[0]
    assert aerial_image.shape[0] == B
    # pos-embed bicubic interpolation is the identity because the pretrained
    # pos-embed grid equals the image patch grid (w0 == h0 == M).
    # TODO(synk): bicubic pos-embed interpolation for mismatched grids not implemented.
    assert IMG // PATCH == POS_GRID
    pos = params["pos_embed"][0]                                        # (T, D)

    imgs = jnp.concatenate([ground_image, aerial_image], axis=0)        # (2B, C, H, W)
    patches = extract_patches(imgs, PATCH)                              # (2B, N, PD_RAW)
    nimg = NVIEWS * B

    # Row 0 is a zero "patch" (its embedding becomes the CLS slot); rows
    # TOKENS..T_PAD are zero pad rows; patch dim zero-padded to PD_PAD.
    pat = jnp.zeros((nimg, T_PAD, PD_PAD), jnp.float32)
    pat = pat.at[:, 1:TOKENS, :PD_RAW].set(patches)

    # Additive term per image: row 0 -> cls + pos[0]; rows 1..N -> conv bias + pos[1:];
    # pad rows stay zero.
    add = jnp.zeros((T_PAD, EMBED_DIM), jnp.float32)
    add = add.at[0].set((params["cls_token"] + pos[:1])[0])
    add = add.at[1:TOKENS].set(params["patch_b"] + pos[1:])

    out = encode_images(pat, add, params)                               # (2B, T_PAD, D)
    out = out[:, 1:TOKENS, :].reshape(NVIEWS, B, NUM_PATCHES, EMBED_DIM)
    return out[0], out[1]


# ------------------------------- parameter init -------------------------------
def init_params(key):
    D, H, hd = EMBED_DIM, NUM_HEADS, HEAD_DIM
    HID, T = HIDDEN, TOKENS
    keys = iter(jax.random.split(key, 8 * DEPTH + 8))
    nrm = lambda shape, s=0.02: (s * jax.random.normal(next(keys), shape)).astype(jnp.float32)

    params = {
        "patch_b": nrm((1, D)),
        "cls_token": nrm((1, D)),
        "pos_embed": nrm((1, T, D)),
        "norm_w": jnp.ones((1, D), jnp.float32),
        "norm_b": jnp.zeros((1, D), jnp.float32),
    }
    # conv weight (D, C, P, P) stored pre-reshaped as (C*P*P, D), zero-padded to PD_PAD,
    # bf16 for the MXU.
    patch_w = nrm((PD_RAW, D))
    params["patch_w"] = (jnp.zeros((PD_PAD, D), jnp.float32)
                         .at[:PD_RAW].set(patch_w).astype(jnp.bfloat16))

    scale = 1.0 / math.sqrt(hd)

    def pad_vec(v):
        return jnp.zeros((VEC_PAD,), jnp.float32).at[:v.shape[0]].set(v)

    qkv_w_l, proj_w_l, fc1_w_l, fc2_w_l, vecs_l = [], [], [], [], []
    for _ in range(DEPTH):
        qkv_w = nrm((D, 3 * D)); qkv_b = nrm((3 * D,))
        proj_w = nrm((D, D));    proj_b = nrm((D,))
        fc1_w = nrm((D, HID));   fc1_b = nrm((HID,))
        fc2_w = nrm((HID, D));   fc2_b = nrm((D,))
        ln1_w = jnp.ones((D,), jnp.float32); ln1_b = jnp.zeros((D,), jnp.float32)
        ln2_w = jnp.ones((D,), jnp.float32); ln2_b = jnp.zeros((D,), jnp.float32)
        ls1 = jnp.full((D,), 1e-5, jnp.float32)
        ls2 = jnp.full((D,), 1e-5, jnp.float32)

        # Fold the 1/sqrt(head_dim) attention scale into the q part of qkv.
        qkv_w = qkv_w.at[:, :D].multiply(scale)
        qkv_b = qkv_b.at[:D].multiply(scale)

        qkv_w_l.append(qkv_w); proj_w_l.append(proj_w)
        fc1_w_l.append(fc1_w); fc2_w_l.append(fc2_w)
        vecs_l.append(jnp.stack(
            [pad_vec(ln1_w), pad_vec(ln1_b), pad_vec(qkv_b), pad_vec(proj_b),
             pad_vec(ls1), pad_vec(ln2_w), pad_vec(ln2_b), pad_vec(fc1_b),
             pad_vec(fc2_b), pad_vec(ls2)], axis=0))                   # (NVEC, VEC_PAD)

    params.update({
        "qkv_w": jnp.stack(qkv_w_l).astype(jnp.bfloat16),   # (DEPTH, D, 3D)
        "proj_w": jnp.stack(proj_w_l).astype(jnp.bfloat16), # (DEPTH, D, D)
        "fc1_w": jnp.stack(fc1_w_l).astype(jnp.bfloat16),   # (DEPTH, D, HID)
        "fc2_w": jnp.stack(fc2_w_l).astype(jnp.bfloat16),   # (DEPTH, HID, D)
        "vecs": jnp.stack(vecs_l),                          # (DEPTH, NVEC, VEC_PAD) f32
    })
    return params


if __name__ == "__main__":
    key = jax.random.PRNGKey(0)
    kp, kg, ka = jax.random.split(key, 3)

    B, C = 2, 3
    params = init_params(kp)
    ground_image = jax.random.normal(kg, (B, C, IMG, IMG), jnp.float32)
    aerial_image = jax.random.normal(ka, (B, C, IMG, IMG), jnp.float32)

    fwd = jax.jit(crossview_forward)
    ground_tokens, aerial_tokens = fwd(params, ground_image, aerial_image)
    jax.block_until_ready((ground_tokens, aerial_tokens))

    assert ground_tokens.shape == (B, NUM_PATCHES, EMBED_DIM), ground_tokens.shape
    assert aerial_tokens.shape == (B, NUM_PATCHES, EMBED_DIM), aerial_tokens.shape
    assert bool(jnp.isfinite(ground_tokens).all()) and bool(jnp.isfinite(aerial_tokens).all())
    print("KERNEL_OK")
</pallas_src>

<mosaic_0001>
module attributes {stable_mosaic.version = 11 : i64} {
  func.func @encoder_kernel(%arg0: i32, %arg1: i32, %arg2: memref<1x8x640xf32, #tpu.memory_space<vmem>>, %arg3: memref<8x32xf32, #tpu.memory_space<vmem>>, %arg4: memref<640x32xbf16, #tpu.memory_space<vmem>>, %arg5: memref<1x10x128xf32, #tpu.memory_space<vmem>>, %arg6: memref<1x32x96xbf16, #tpu.memory_space<vmem>>, %arg7: memref<1x32x32xbf16, #tpu.memory_space<vmem>>, %arg8: memref<1x32x128xbf16, #tpu.memory_space<vmem>>, %arg9: memref<1x128x32xbf16, #tpu.memory_space<vmem>>, %arg10: memref<1x32xf32, #tpu.memory_space<vmem>>, %arg11: memref<1x32xf32, #tpu.memory_space<vmem>>, %arg12: memref<1x8x32xf32, #tpu.memory_space<vmem>>, %arg13: memref<8x32xf32, #tpu.memory_space<vmem>>) attributes {dimension_semantics = [#tpu.dimension_semantics<parallel>, #tpu.dimension_semantics<arbitrary>], iteration_bounds = array<i64: 4, 2>, scalar_prefetch = 0 : i64, scratch_operands = 1 : i64, tpu.core_type = #tpu.core_type<tc>, window_params = [{transform_indices = @transform_0, window_bounds = array<i64: 1, 8, 640>}, {pipeline_mode = #tpu.pipeline_mode<synchronous>, transform_indices = @transform_1, window_bounds = array<i64: 8, 32>}, {pipeline_mode = #tpu.pipeline_mode<synchronous>, transform_indices = @transform_2, window_bounds = array<i64: 640, 32>}, {transform_indices = @transform_3, window_bounds = array<i64: 1, 10, 128>}, {transform_indices = @transform_4, window_bounds = array<i64: 1, 32, 96>}, {transform_indices = @transform_5, window_bounds = array<i64: 1, 32, 32>}, {transform_indices = @transform_6, window_bounds = array<i64: 1, 32, 128>}, {transform_indices = @transform_7, window_bounds = array<i64: 1, 128, 32>}, {pipeline_mode = #tpu.pipeline_mode<synchronous>, transform_indices = @transform_8, window_bounds = array<i64: 1, 32>}, {pipeline_mode = #tpu.pipeline_mode<synchronous>, transform_indices = @transform_9, window_bounds = array<i64: 1, 32>}, {transform_indices = @transform_10, window_bounds = array<i64: 1, 8, 32>}]} {
    %c0_i32 = arith.constant 0 : i32
    %0 = arith.cmpi eq, %arg1, %c0_i32 : i32
    %1 = arith.extui %0 : i1 to i32
    %c0_i32_0 = arith.constant 0 : i32
    %2 = arith.cmpi ne, %1, %c0_i32_0 : i32
    scf.if %2 {
      %c0_57 = arith.constant 0 : index
      %c0_58 = arith.constant 0 : index
      %c0_59 = arith.constant 0 : index
      %180 = vector.load %arg2[%c0_57, %c0_58, %c0_59] : memref<1x8x640xf32, #tpu.memory_space<vmem>>, vector<1x8x640xf32>
      %181 = vector.shape_cast %180 : vector<1x8x640xf32> to vector<8x640xf32>
      %182 = arith.truncf %181 : vector<8x640xf32> to vector<8x640xbf16>
      %c0_60 = arith.constant 0 : index
      %c0_61 = arith.constant 0 : index
      %183 = vector.load %arg4[%c0_60, %c0_61] : memref<640x32xbf16, #tpu.memory_space<vmem>>, vector<640x32xbf16>
      %cst_62 = arith.constant dense<0.000000e+00> : vector<8x32xf32>
      %184 = tpu.matmul %182, %183, %cst_62 {dimension_numbers = #tpu.dot_dimension_numbers<[1], [0], [0], [1], [0, 0, 1, 1], [], []>} : vector<8x640xbf16>, vector<640x32xbf16>, vector<8x32xf32> -> vector<8x32xf32>
      %c0_63 = arith.constant 0 : index
      %c0_64 = arith.constant 0 : index
      %185 = vector.load %arg3[%c0_63, %c0_64] : memref<8x32xf32, #tpu.memory_space<vmem>>, vector<8x32xf32>
      %186 = arith.addf %184, %185 : vector<8x32xf32>
      %c0_65 = arith.constant 0 : index
      %c0_66 = arith.constant 0 : index
      %187 = vector.load %arg13[%c0_65, %c0_66] : memref<8x32xf32, #tpu.memory_space<vmem>>, vector<8x32xf32>
      tpu.vector_store %arg13[%c0_65, %c0_66], %186 {strides = array<i32>} : memref<8x32xf32, #tpu.memory_space<vmem>>, vector<8x32xf32>,
    } else {
    }
    %c0 = arith.constant 0 : index
    %c0_1 = arith.constant 0 : index
    %3 = vector.load %arg13[%c0, %c0_1] : memref<8x32xf32, #tpu.memory_space<vmem>>, vector<8x32xf32>
    %c0_2 = arith.constant 0 : index
    %c0_3 = arith.constant 0 : index
    %c0_4 = arith.constant 0 : index
    %4 = vector.load %arg5[%c0_2, %c0_3, %c0_4] : memref<1x10x128xf32, #tpu.memory_space<vmem>>, vector<1x10x128xf32>
    %5 = vector.shape_cast %4 : vector<1x10x128xf32> to vector<10x128xf32>
    %6 = vector.extract_strided_slice %5 {offsets = [0, 0], sizes = [1, 32], strides = [1, 1]} : vector<10x128xf32> to vector<1x32xf32>
    %7 = vector.extract_strided_slice %5 {offsets = [1, 0], sizes = [1, 32], strides = [1, 1]} : vector<10x128xf32> to vector<1x32xf32>
    %8 = vector.extract_strided_slice %5 {offsets = [2, 0], sizes = [1, 96], strides = [1, 1]} : vector<10x128xf32> to vector<1x96xf32>
    %9 = vector.extract_strided_slice %5 {offsets = [3, 0], sizes = [1, 32], strides = [1, 1]} : vector<10x128xf32> to vector<1x32xf32>
    %10 = vector.extract_strided_slice %5 {offsets = [4, 0], sizes = [1, 32], strides = [1, 1]} : vector<10x128xf32> to vector<1x32xf32>
    %11 = vector.extract_strided_slice %5 {offsets = [5, 0], sizes = [1, 32], strides = [1, 1]} : vector<10x128xf32> to vector<1x32xf32>
    %12 = vector.extract_strided_slice %5 {offsets = [6, 0], sizes = [1, 32], strides = [1, 1]} : vector<10x128xf32> to vector<1x32xf32>
    %13 = vector.extract_strided_slice %5 {offsets = [7, 0], sizes = [1, 128], strides = [1, 1]} : vector<10x128xf32> to vector<1x128xf32>
    %14 = vector.extract_strided_slice %5 {offsets = [8, 0], sizes = [1, 32], strides = [1, 1]} : vector<10x128xf32> to vector<1x32xf32>
    %15 = vector.extract_strided_slice %5 {offsets = [9, 0], sizes = [1, 32], strides = [1, 1]} : vector<10x128xf32> to vector<1x32xf32>
    %cst = arith.constant dense<0.000000e+00> : vector<8xf32>
    %16 = vector.multi_reduction <add>, %3, %cst [1] : vector<8x32xf32> to vector<8xf32>
    %17 = vector.shape_cast %16 : vector<8xf32> to vector<8x1xf32>
    %cst_5 = arith.constant 3.200000e+01 : f32
    %18 = vector.broadcast %cst_5 : f32 to vector<8x1xf32>
    %19 = arith.divf %17, %18 : vector<8x1xf32>
    %20 = vector.broadcast %19 : vector<8x1xf32> to vector<8x32xf32>
    %21 = arith.subf %3, %20 : vector<8x32xf32>
    %22 = arith.mulf %21, %21 : vector<8x32xf32>
    %cst_6 = arith.constant dense<0.000000e+00> : vector<8xf32>
    %23 = vector.multi_reduction <add>, %22, %cst_6 [1] : vector<8x32xf32> to vector<8xf32>
    %24 = vector.shape_cast %23 : vector<8xf32> to vector<8x1xf32>
    %cst_7 = arith.constant 3.200000e+01 : f32
    %25 = vector.broadcast %cst_7 : f32 to vector<8x1xf32>
    %26 = arith.divf %24, %25 : vector<8x1xf32>
    %27 = vector.broadcast %19 : vector<8x1xf32> to vector<8x32xf32>
    %28 = arith.subf %3, %27 : vector<8x32xf32>
    %cst_8 = arith.constant 9.99999997E-7 : f32
    %29 = vector.broadcast %cst_8 : f32 to vector<8x1xf32>
    %30 = arith.addf %26, %29 : vector<8x1xf32>
    %31 = math.rsqrt %30 : vector<8x1xf32>
    %32 = vector.broadcast %31 : vector<8x1xf32> to vector<8x32xf32>
    %33 = arith.mulf %28, %32 : vector<8x32xf32>
    %34 = vector.broadcast %6 : vector<1x32xf32> to vector<8x32xf32>
    %35 = arith.mulf %33, %34 : vector<8x32xf32>
    %36 = vector.broadcast %7 : vector<1x32xf32> to vector<8x32xf32>
    %37 = arith.addf %35, %36 : vector<8x32xf32>
    %38 = arith.truncf %37 : vector<8x32xf32> to vector<8x32xbf16>
    %c0_9 = arith.constant 0 : index
    %c0_10 = arith.constant 0 : index
    %c0_11 = arith.constant 0 : index
    %39 = vector.load %arg6[%c0_9, %c0_10, %c0_11] : memref<1x32x96xbf16, #tpu.memory_space<vmem>>, vector<1x32x96xbf16>
    %40 = vector.shape_cast %39 : vector<1x32x96xbf16> to vector<32x96xbf16>
    %cst_12 = arith.constant dense<0.000000e+00> : vector<8x96xf32>
    %41 = tpu.matmul %38, %40, %cst_12 {dimension_numbers = #tpu.dot_dimension_numbers<[1], [0], [0], [1], [0, 0, 1, 1], [], []>} : vector<8x32xbf16>, vector<32x96xbf16>, vector<8x96xf32> -> vector<8x96xf32>
    %42 = vector.broadcast %8 : vector<1x96xf32> to vector<8x96xf32>
    %43 = arith.addf %41, %42 : vector<8x96xf32>
    %44 = tpu.iota {dimensions = array<i32: 1>} : vector<8x8xi32>
    %c5_i32 = arith.constant 5 : i32
    %45 = vector.broadcast %c5_i32 : i32 to vector<8x8xi32>
    %46 = arith.cmpi slt, %44, %45 : vector<8x8xi32>
    %cst_13 = arith.constant 0.000000e+00 : f32
    %cst_14 = arith.constant -1.000000e+30 : f32
    %47 = vector.broadcast %cst_13 : f32 to vector<8x8xf32>
    %48 = vector.broadcast %cst_14 : f32 to vector<8x8xf32>
    %49 = arith.select %46, %47, %48 : vector<8x8xi1>, vector<8x8xf32>
    %50 = vector.extract_strided_slice %43 {offsets = [0, 0], sizes = [8, 16], strides = [1, 1]} : vector<8x96xf32> to vector<8x16xf32>
    %51 = vector.extract_strided_slice %43 {offsets = [0, 32], sizes = [8, 16], strides = [1, 1]} : vector<8x96xf32> to vector<8x16xf32>
    %52 = vector.extract_strided_slice %43 {offsets = [0, 64], sizes = [8, 16], strides = [1, 1]} : vector<8x96xf32> to vector<8x16xf32>
    %53 = arith.truncf %50 : vector<8x16xf32> to vector<8x16xbf16>
    %54 = arith.truncf %51 : vector<8x16xf32> to vector<8x16xbf16>
    %cst_15 = arith.constant dense<0.000000e+00> : vector<8x8xf32>
    %55 = tpu.matmul %53, %54, %cst_15 {dimension_numbers = #tpu.dot_dimension_numbers<[1], [1], [0], [0], [0, 0, 1, 0], [], []>} : vector<8x16xbf16>, vector<8x16xbf16>, vector<8x8xf32> -> vector<8x8xf32>
    %56 = arith.addf %55, %49 : vector<8x8xf32>
    %cst_16 = arith.constant dense<0xFF800000> : vector<8xf32>
    %57 = vector.multi_reduction <maximumf>, %56, %cst_16 [1] : vector<8x8xf32> to vector<8xf32>
    %58 = vector.shape_cast %57 : vector<8xf32> to vector<8x1xf32>
    %59 = vector.broadcast %58 : vector<8x1xf32> to vector<8x8xf32>
    %60 = arith.subf %56, %59 : vector<8x8xf32>
    %61 = math.exp %60 : vector<8x8xf32>
    %cst_17 = arith.constant dense<0.000000e+00> : vector<8xf32>
    %62 = vector.multi_reduction <add>, %61, %cst_17 [1] : vector<8x8xf32> to vector<8xf32>
    %63 = vector.shape_cast %62 : vector<8xf32> to vector<8x1xf32>
    %64 = tpu.reciprocal %63 {approx = true} : vector<8x1xf32> -> vector<8x1xf32>
    %65 = vector.broadcast %64 : vector<8x1xf32> to vector<8x8xf32>
    %66 = arith.mulf %61, %65 : vector<8x8xf32>
    %67 = arith.truncf %66 : vector<8x8xf32> to vector<8x8xbf16>
    %68 = arith.truncf %52 : vector<8x16xf32> to vector<8x16xbf16>
    %cst_18 = arith.constant dense<0.000000e+00> : vector<8x16xf32>
    %69 = tpu.matmul %67, %68, %cst_18 {dimension_numbers = #tpu.dot_dimension_numbers<[1], [0], [0], [1], [0, 0, 1, 1], [], []>} : vector<8x8xbf16>, vector<8x16xbf16>, vector<8x16xf32> -> vector<8x16xf32>
    %70 = vector.extract_strided_slice %43 {offsets = [0, 16], sizes = [8, 16], strides = [1, 1]} : vector<8x96xf32> to vector<8x16xf32>
    %71 = vector.extract_strided_slice %43 {offsets = [0, 48], sizes = [8, 16], strides = [1, 1]} : vector<8x96xf32> to vector<8x16xf32>
    %72 = vector.extract_strided_slice %43 {offsets = [0, 80], sizes = [8, 16], strides = [1, 1]} : vector<8x96xf32> to vector<8x16xf32>
    %73 = arith.truncf %70 : vector<8x16xf32> to vector<8x16xbf16>
    %74 = arith.truncf %71 : vector<8x16xf32> to vector<8x16xbf16>
    %cst_19 = arith.constant dense<0.000000e+00> : vector<8x8xf32>
    %75 = tpu.matmul %73, %74, %cst_19 {dimension_numbers = #tpu.dot_dimension_numbers<[1], [1], [0], [0], [0, 0, 1, 0], [], []>} : vector<8x16xbf16>, vector<8x16xbf16>, vector<8x8xf32> -> vector<8x8xf32>
    %76 = arith.addf %75, %49 : vector<8x8xf32>
    %cst_20 = arith.constant dense<0xFF800000> : vector<8xf32>
    %77 = vector.multi_reduction <maximumf>, %76, %cst_20 [1] : vector<8x8xf32> to vector<8xf32>
    %78 = vector.shape_cast %77 : vector<8xf32> to vector<8x1xf32>
    %79 = vector.broadcast %78 : vector<8x1xf32> to vector<8x8xf32>
    %80 = arith.subf %76, %79 : vector<8x8xf32>
    %81 = math.exp %80 : vector<8x8xf32>
    %cst_21 = arith.constant dense<0.000000e+00> : vector<8xf32>
    %82 = vector.multi_reduction <add>, %81, %cst_21 [1] : vector<8x8xf32> to vector<8xf32>
    %83 = vector.shape_cast %82 : vector<8xf32> to vector<8x1xf32>
    %84 = tpu.reciprocal %83 {approx = true} : vector<8x1xf32> -> vector<8x1xf32>
    %85 = vector.broadcast %84 : vector<8x1xf32> to vector<8x8xf32>
    %86 = arith.mulf %81, %85 : vector<8x8xf32>
    %87 = arith.truncf %86 : vector<8x8xf32> to vector<8x8xbf16>
    %88 = arith.truncf %72 : vector<8x16xf32> to vector<8x16xbf16>
    %cst_22 = arith.constant dense<0.000000e+00> : vector<8x16xf32>
    %89 = tpu.matmul %87, %88, %cst_22 {dimension_numbers = #tpu.dot_dimension_numbers<[1], [0], [0], [1], [0, 0, 1, 1], [], []>} : vector<8x8xbf16>, vector<8x16xbf16>, vector<8x16xf32> -> vector<8x16xf32>
    %90 = tpu.concatenate %69, %89 in 1 : vector<8x16xf32>, vector<8x16xf32> -> vector<8x32xf32>
    %91 = arith.truncf %90 : vector<8x32xf32> to vector<8x32xbf16>
    %c0_23 = arith.constant 0 : index
    %c0_24 = arith.constant 0 : index
    %c0_25 = arith.constant 0 : index
    %92 = vector.load %arg7[%c0_23, %c0_24, %c0_25] : memref<1x32x32xbf16, #tpu.memory_space<vmem>>, vector<1x32x32xbf16>
    %93 = vector.shape_cast %92 : vector<1x32x32xbf16> to vector<32x32xbf16>
    %cst_26 = arith.constant dense<0.000000e+00> : vector<8x32xf32>
    %94 = tpu.matmul %91, %93, %cst_26 {dimension_numbers = #tpu.dot_dimension_numbers<[1], [0], [0], [1], [0, 0, 1, 1], [], []>} : vector<8x32xbf16>, vector<32x32xbf16>, vector<8x32xf32> -> vector<8x32xf32>
    %95 = vector.broadcast %9 : vector<1x32xf32> to vector<8x32xf32>
    %96 = arith.addf %94, %95 : vector<8x32xf32>
    %97 = vector.broadcast %10 : vector<1x32xf32> to vector<8x32xf32>
    %98 = arith.mulf %97, %96 : vector<8x32xf32>
    %99 = arith.addf %3, %98 : vector<8x32xf32>
    %cst_27 = arith.constant dense<0.000000e+00> : vector<8xf32>
    %100 = vector.multi_reduction <add>, %99, %cst_27 [1] : vector<8x32xf32> to vector<8xf32>
    %101 = vector.shape_cast %100 : vector<8xf32> to vector<8x1xf32>
    %cst_28 = arith.constant 3.200000e+01 : f32
    %102 = vector.broadcast %cst_28 : f32 to vector<8x1xf32>
    %103 = arith.divf %101, %102 : vector<8x1xf32>
    %104 = vector.broadcast %103 : vector<8x1xf32> to vector<8x32xf32>
    %105 = arith.subf %99, %104 : vector<8x32xf32>
    %106 = arith.mulf %105, %105 : vector<8x32xf32>
    %cst_29 = arith.constant dense<0.000000e+00> : vector<8xf32>
    %107 = vector.multi_reduction <add>, %106, %cst_29 [1] : vector<8x32xf32> to vector<8xf32>
    %108 = vector.shape_cast %107 : vector<8xf32> to vector<8x1xf32>
    %cst_30 = arith.constant 3.200000e+01 : f32
    %109 = vector.broadcast %cst_30 : f32 to vector<8x1xf32>
    %110 = arith.divf %108, %109 : vector<8x1xf32>
    %111 = vector.broadcast %103 : vector<8x1xf32> to vector<8x32xf32>
    %112 = arith.subf %99, %111 : vector<8x32xf32>
    %cst_31 = arith.constant 9.99999997E-7 : f32
    %113 = vector.broadcast %cst_31 : f32 to vector<8x1xf32>
    %114 = arith.addf %110, %113 : vector<8x1xf32>
    %115 = math.rsqrt %114 : vector<8x1xf32>
    %116 = vector.broadcast %115 : vector<8x1xf32> to vector<8x32xf32>
    %117 = arith.mulf %112, %116 : vector<8x32xf32>
    %118 = vector.broadcast %11 : vector<1x32xf32> to vector<8x32xf32>
    %119 = arith.mulf %117, %118 : vector<8x32xf32>
    %120 = vector.broadcast %12 : vector<1x32xf32> to vector<8x32xf32>
    %121 = arith.addf %119, %120 : vector<8x32xf32>
    %122 = arith.truncf %121 : vector<8x32xf32> to vector<8x32xbf16>
    %c0_32 = arith.constant 0 : index
    %c0_33 = arith.constant 0 : index
    %c0_34 = arith.constant 0 : index
    %123 = vector.load %arg8[%c0_32, %c0_33, %c0_34] : memref<1x32x128xbf16, #tpu.memory_space<vmem>>, vector<1x32x128xbf16>
    %124 = vector.shape_cast %123 : vector<1x32x128xbf16> to vector<32x128xbf16>
    %cst_35 = arith.constant dense<0.000000e+00> : vector<8x128xf32>
    %125 = tpu.matmul %122, %124, %cst_35 {dimension_numbers = #tpu.dot_dimension_numbers<[1], [0], [0], [1], [0, 0, 1, 1], [], []>} : vector<8x32xbf16>, vector<32x128xbf16>, vector<8x128xf32> -> vector<8x128xf32>
    %126 = vector.broadcast %13 : vector<1x128xf32> to vector<8x128xf32>
    %127 = arith.addf %125, %126 : vector<8x128xf32>
    %cst_36 = arith.constant 5.000000e-01 : f32
    %128 = vector.broadcast %cst_36 : f32 to vector<8x128xf32>
    %129 = arith.mulf %128, %127 : vector<8x128xf32>
    %cst_37 = arith.constant 0.707106769 : f32
    %130 = vector.broadcast %cst_37 : f32 to vector<8x128xf32>
    %131 = arith.mulf %127, %130 : vector<8x128xf32>
    %132 = math.absf %131 : vector<8x128xf32>
    %cst_38 = arith.constant 0.327591091 : f32
    %133 = vector.broadcast %cst_38 : f32 to vector<8x128xf32>
    %134 = arith.mulf %133, %132 : vector<8x128xf32>
    %cst_39 = arith.constant 1.000000e+00 : f32
    %135 = vector.broadcast %cst_39 : f32 to vector<8x128xf32>
    %136 = arith.addf %135, %134 : vector<8x128xf32>
    %137 = tpu.reciprocal %136 : vector<8x128xf32> -> vector<8x128xf32>
    %cst_40 = arith.constant 1.06140542 : f32
    %138 = vector.broadcast %cst_40 : f32 to vector<8x128xf32>
    %139 = arith.mulf %138, %137 : vector<8x128xf32>
    %cst_41 = arith.constant -1.45315206 : f32
    %140 = vector.broadcast %cst_41 : f32 to vector<8x128xf32>
    %141 = arith.addf %139, %140 : vector<8x128xf32>
    %142 = arith.mulf %141, %137 : vector<8x128xf32>
    %cst_42 = arith.constant 1.42141378 : f32
    %143 = vector.broadcast %cst_42 : f32 to vector<8x128xf32>
    %144 = arith.addf %142, %143 : vector<8x128xf32>
    %145 = arith.mulf %144, %137 : vector<8x128xf32>
    %cst_43 = arith.constant -0.284496725 : f32
    %146 = vector.broadcast %cst_43 : f32 to vector<8x128xf32>
    %147 = arith.addf %145, %146 : vector<8x128xf32>
    %148 = arith.mulf %147, %137 : vector<8x128xf32>
    %cst_44 = arith.constant 0.254829586 : f32
    %149 = vector.broadcast %cst_44 : f32 to vector<8x128xf32>
    %150 = arith.addf %148, %149 : vector<8x128xf32>
    %151 = arith.mulf %150, %137 : vector<8x128xf32>
    %cst_45 = arith.constant 0.000000e+00 : f32
    %152 = vector.broadcast %cst_45 : f32 to vector<8x128xf32>
    %153 = arith.subf %152, %132 : vector<8x128xf32>
    %154 = arith.mulf %153, %132 : vector<8x128xf32>
    %155 = math.exp %154 : vector<8x128xf32>
    %156 = arith.mulf %151, %155 : vector<8x128xf32>
    %cst_46 = arith.constant 1.000000e+00 : f32
    %157 = vector.broadcast %cst_46 : f32 to vector<8x128xf32>
    %158 = arith.subf %157, %156 : vector<8x128xf32>
    %cst_47 = arith.constant 0.000000e+00 : f32
    %159 = vector.broadcast %cst_47 : f32 to vector<8x128xf32>
    %160 = arith.cmpf oge, %131, %159 : vector<8x128xf32>
    %cst_48 = arith.constant 0.000000e+00 : f32
    %161 = vector.broadcast %cst_48 : f32 to vector<8x128xf32>
    %162 = arith.subf %161, %158 : vector<8x128xf32>
    %163 = arith.select %160, %158, %162 : vector<8x128xi1>, vector<8x128xf32>
    %cst_49 = arith.constant 1.000000e+00 : f32
    %164 = vector.broadcast %cst_49 : f32 to vector<8x128xf32>
    %165 = arith.addf %164, %163 : vector<8x128xf32>
    %166 = arith.mulf %129, %165 : vector<8x128xf32>
    %167 = arith.truncf %166 : vector<8x128xf32> to vector<8x128xbf16>
    %c0_50 = arith.constant 0 : index
    %c0_51 = arith.constant 0 : index
    %c0_52 = arith.constant 0 : index
    %168 = vector.load %arg9[%c0_50, %c0_51, %c0_52] : memref<1x128x32xbf16, #tpu.memory_space<vmem>>, vector<1x128x32xbf16>
    %169 = vector.shape_cast %168 : vector<1x128x32xbf16> to vector<128x32xbf16>
    %cst_53 = arith.constant dense<0.000000e+00> : vector<8x32xf32>
    %170 = tpu.matmul %167, %169, %cst_53 {dimension_numbers = #tpu.dot_dimension_numbers<[1], [0], [0], [1], [0, 0, 1, 1], [], []>} : vector<8x128xbf16>, vector<128x32xbf16>, vector<8x32xf32> -> vector<8x32xf32>
    %171 = vector.broadcast %14 : vector<1x32xf32> to vector<8x32xf32>
    %172 = arith.addf %170, %171 : vector<8x32xf32>
    %173 = vector.broadcast %15 : vector<1x32xf32> to vector<8x32xf32>
    %174 = arith.mulf %173, %172 : vector<8x32xf32>
    %175 = arith.addf %99, %174 : vector<8x32xf32>
    %c0_54 = arith.constant 0 : index
    %c0_55 = arith.constant 0 : index
    %176 = vector.load %arg13[%c0_54, %c0_55] : memref<8x32xf32, #tpu.memory_space<vmem>>, vector<8x32xf32>
    tpu.vector_store %arg13[%c0_54, %c0_55], %175 {strides = array<i32>} : memref<8x32xf32, #tpu.memory_space<vmem>>, vector<8x32xf32>,
    %c1_i32 = arith.constant 1 : i32
    %177 = arith.cmpi eq, %arg1, %c1_i32 : i32
    %178 = arith.extui %177 : i1 to i32
    %c0_i32_56 = arith.constant 0 : i32
    %179 = arith.cmpi ne, %178, %c0_i32_56 : i32
    scf.if %179 {
      %c0_57 = arith.constant 0 : index
      %c0_58 = arith.constant 0 : index
      %180 = vector.load %arg10[%c0_57, %c0_58] : memref<1x32xf32, #tpu.memory_space<vmem>>, vector<1x32xf32>
      %c0_59 = arith.constant 0 : index
      %c0_60 = arith.constant 0 : index
      %181 = vector.load %arg11[%c0_59, %c0_60] : memref<1x32xf32, #tpu.memory_space<vmem>>, vector<1x32xf32>
      %cst_61 = arith.constant dense<0.000000e+00> : vector<8xf32>
      %182 = vector.multi_reduction <add>, %175, %cst_61 [1] : vector<8x32xf32> to vector<8xf32>
      %183 = vector.shape_cast %182 : vector<8xf32> to vector<8x1xf32>
      %cst_62 = arith.constant 3.200000e+01 : f32
      %184 = vector.broadcast %cst_62 : f32 to vector<8x1xf32>
      %185 = arith.divf %183, %184 : vector<8x1xf32>
      %186 = vector.broadcast %185 : vector<8x1xf32> to vector<8x32xf32>
      %187 = arith.subf %175, %186 : vector<8x32xf32>
      %188 = arith.mulf %187, %187 : vector<8x32xf32>
      %cst_63 = arith.constant dense<0.000000e+00> : vector<8xf32>
      %189 = vector.multi_reduction <add>, %188, %cst_63 [1] : vector<8x32xf32> to vector<8xf32>
      %190 = vector.shape_cast %189 : vector<8xf32> to vector<8x1xf32>
      %cst_64 = arith.constant 3.200000e+01 : f32
      %191 = vector.broadcast %cst_64 : f32 to vector<8x1xf32>
      %192 = arith.divf %190, %191 : vector<8x1xf32>
      %193 = vector.broadcast %185 : vector<8x1xf32> to vector<8x32xf32>
      %194 = arith.subf %175, %193 : vector<8x32xf32>
      %cst_65 = arith.constant 9.99999997E-7 : f32
      %195 = vector.broadcast %cst_65 : f32 to vector<8x1xf32>
      %196 = arith.addf %192, %195 : vector<8x1xf32>
      %197 = math.rsqrt %196 : vector<8x1xf32>
      %198 = vector.broadcast %197 : vector<8x1xf32> to vector<8x32xf32>
      %199 = arith.mulf %194, %198 : vector<8x32xf32>
      %200 = vector.broadcast %180 : vector<1x32xf32> to vector<8x32xf32>
      %201 = arith.mulf %199, %200 : vector<8x32xf32>
      %202 = vector.broadcast %181 : vector<1x32xf32> to vector<8x32xf32>
      %203 = arith.addf %201, %202 : vector<8x32xf32>
      %c0_66 = arith.constant 0 : index
      %c0_67 = arith.constant 0 : index
      %c0_68 = arith.constant 0 : index
      %204 = vector.load %arg12[%c0_66, %c0_67, %c0_68] : memref<1x8x32xf32, #tpu.memory_space<vmem>>, vector<1x8x32xf32>
      %205 = vector.shape_cast %204 : vector<1x8x32xf32> to vector<8x32xf32>
      %206 = vector.shape_cast %203 : vector<8x32xf32> to vector<1x8x32xf32>
      tpu.vector_store %arg12[%c0_66, %c0_67, %c0_68], %206 {strides = array<i32>} : memref<1x8x32xf32, #tpu.memory_space<vmem>>, vector<1x8x32xf32>,
    } else {
    }
    return
  }
  func.func @transform_0(%arg0: i32, %arg1: i32) -> (i32, i32, i32) {
    %c0_i32 = arith.constant 0 : i32
    %c0_i32_0 = arith.constant 0 : i32
    %c0_i32_1 = arith.constant 0 : i32
    return %arg0, %c0_i32, %c0_i32_0 : i32, i32, i32
  }
  func.func @transform_1(%arg0: i32, %arg1: i32) -> (i32, i32) {
    %c0_i32 = arith.constant 0 : i32
    %c0_i32_0 = arith.constant 0 : i32
    %c0_i32_1 = arith.constant 0 : i32
    return %c0_i32, %c0_i32_0 : i32, i32
  }
  func.func @transform_2(%arg0: i32, %arg1: i32) -> (i32, i32) {
    %c0_i32 = arith.constant 0 : i32
    %c0_i32_0 = arith.constant 0 : i32
    %c0_i32_1 = arith.constant 0 : i32
    return %c0_i32, %c0_i32_0 : i32, i32
  }
  func.func @transform_3(%arg0: i32, %arg1: i32) -> (i32, i32, i32) {
    %c0_i32 = arith.constant 0 : i32
    %c0_i32_0 = arith.constant 0 : i32
    %c0_i32_1 = arith.constant 0 : i32
    return %arg1, %c0_i32, %c0_i32_0 : i32, i32, i32
  }
  func.func @transform_4(%arg0: i32, %arg1: i32) -> (i32, i32, i32) {
    %c0_i32 = arith.constant 0 : i32
    %c0_i32_0 = arith.constant 0 : i32
    %c0_i32_1 = arith.constant 0 : i32
    return %arg1, %c0_i32, %c0_i32_0 : i32, i32, i32
  }
  func.func @transform_5(%arg0: i32, %arg1: i32) -> (i32, i32, i32) {
    %c0_i32 = arith.constant 0 : i32
    %c0_i32_0 = arith.constant 0 : i32
    %c0_i32_1 = arith.constant 0 : i32
    return %arg1, %c0_i32, %c0_i32_0 : i32, i32, i32
  }
  func.func @transform_6(%arg0: i32, %arg1: i32) -> (i32, i32, i32) {
    %c0_i32 = arith.constant 0 : i32
    %c0_i32_0 = arith.constant 0 : i32
    %c0_i32_1 = arith.constant 0 : i32
    return %arg1, %c0_i32, %c0_i32_0 : i32, i32, i32
  }
  func.func @transform_7(%arg0: i32, %arg1: i32) -> (i32, i32, i32) {
    %c0_i32 = arith.constant 0 : i32
    %c0_i32_0 = arith.constant 0 : i32
    %c0_i32_1 = arith.constant 0 : i32
    return %arg1, %c0_i32, %c0_i32_0 : i32, i32, i32
  }
  func.func @transform_8(%arg0: i32, %arg1: i32) -> (i32, i32) {
    %c0_i32 = arith.constant 0 : i32
    %c0_i32_0 = arith.constant 0 : i32
    %c0_i32_1 = arith.constant 0 : i32
    return %c0_i32, %c0_i32_0 : i32, i32
  }
  func.func @transform_9(%arg0: i32, %arg1: i32) -> (i32, i32) {
    %c0_i32 = arith.constant 0 : i32
    %c0_i32_0 = arith.constant 0 : i32
    %c0_i32_1 = arith.constant 0 : i32
    return %c0_i32, %c0_i32_0 : i32, i32
  }
  func.func @transform_10(%arg0: i32, %arg1: i32) -> (i32, i32, i32) {
    %c0_i32 = arith.constant 0 : i32
    %c0_i32_0 = arith.constant 0 : i32
    %c0_i32_1 = arith.constant 0 : i32
    return %arg0, %c0_i32, %c0_i32_0 : i32, i32, i32
  }
}

</mosaic_0001>

<llo_original>
// kernel: crossview_forward.1
$region0: #{crossview_forward.1}
  #allocation0 [shape = 'u32[]', space=smem, size = 0x4, offset = 0x4, fixed_abs, tag = 'smem constant byte address 0x4 - core index']
  #allocation1 [shape = 'u32[144,128]{1,0:T(1,128)}', space=vmem, size = 0x12000, scoped, tag = 'internal scratch']
  #allocation2 [shape = 'f32[8,32]{1,0:T(8,128)}', space=vmem, size = 0x1000, scoped, tag = 'scratch operand']
  %s0 = inlined_call_operand.hbm [shape: f32[4,8,640], index: 0, kind: input, shape index: {}]
  %s1 = inlined_call_operand.hbm [shape: f32[8,32], index: 1, kind: input, shape index: {}]
  %s2 = inlined_call_operand.hbm [shape: bf16[640,32], index: 2, kind: input, shape index: {}]
  %s3 = inlined_call_operand.hbm [shape: f32[2,10,128], index: 3, kind: input, shape index: {}]
  %s4 = inlined_call_operand.hbm [shape: bf16[2,32,96], index: 4, kind: input, shape index: {}]
  %s5 = inlined_call_operand.hbm [shape: bf16[2,32,32], index: 5, kind: input, shape index: {}]
  %s6 = inlined_call_operand.hbm [shape: bf16[2,32,128], index: 6, kind: input, shape index: {}]
  %s7 = inlined_call_operand.hbm [shape: bf16[2,128,32], index: 7, kind: input, shape index: {}]
  %s8 = inlined_call_operand.hbm [shape: f32[1,32], index: 8, kind: input, shape index: {}]
  %s9 = inlined_call_operand.hbm [shape: f32[1,32], index: 9, kind: input, shape index: {}]
  %s10 = inlined_call_operand.hbm [shape: f32[4,8,32], index: 10, kind: output, shape index: {}]
  %s11 = sld [smem:[#allocation0]]
  $region121: #{crossview_forward.1} parent=0
    _
  %s13 = ssub.s32 1, %s11
  %s14 = scalar_select 0, %s13, %s11
  $region1: #{crossview_forward.1} parent=0
    #allocation3 [shape = 'u8[40960]{0}', space=vmem, size = 0xa000, scoped, tag = 'input window, operand 0']
    #allocation4 [shape = 's32[2]{0}', space=sflag, size = 0x8, scoped, tag = 'scoped memory for crossview_forward.1']
    #allocation5 [shape = 's32[2]{0}', space=sflag, size = 0x8, scoped, tag = 'scoped memory for crossview_forward.1']
    #allocation6 [shape = 'u8[4096]{0}', space=vmem, size = 0x1000, scoped, tag = 'input window, operand 1, single buffered']
    #allocation7 [shape = 's32[1]{0}', space=sflag, size = 0x4, scoped, tag = 'scoped memory for crossview_forward.1']
    #allocation8 [shape = 'u8[163840]{0}', space=vmem, size = 0x28000, scoped, tag = 'input window, operand 2, single buffered']
    #allocation9 [shape = 'u8[16384]{0}', space=vmem, size = 0x4000, scoped, tag = 'input window, operand 3']
    #allocation10 [shape = 's32[2]{0}', space=sflag, size = 0x8, scoped, tag = 'scoped memory for crossview_forward.1']
    #allocation11 [shape = 'u8[16384]{0}', space=vmem, size = 0x4000, scoped, tag = 'input window, operand 4']
    #allocation12 [shape = 'u8[16384]{0}', space=vmem, size = 0x4000, scoped, tag = 'input window, operand 5']
    #allocation13 [shape = 's32[2]{0}', space=sflag, size = 0x8, scoped, tag = 'scoped memory for crossview_forward.1']
    #allocation14 [shape = 'u8[16384]{0}', space=vmem, size = 0x4000, scoped, tag = 'input window, operand 6']
    #allocation15 [shape = 'u8[65536]{0}', space=vmem, size = 0x10000, scoped, tag = 'input window, operand 7']
    #allocation16 [shape = 's32[2]{0}', space=sflag, size = 0x8, scoped, tag = 'scoped memory for crossview_forward.1']
    #allocation17 [shape = 'u8[512]{0}', space=vmem, size = 0x400, scoped, tag = 'input window, operand 8, single buffered']
    #allocation18 [shape = 'u8[512]{0}', space=vmem, size = 0x400, scoped, tag = 'input window, operand 9, single buffered']
    #allocation19 [shape = 's32[1]{0}', space=sflag, size = 0x4, scoped, tag = 'scoped memory for crossview_forward.1']
    #allocation20 [shape = 'u8[8192]{0}', space=vmem, size = 0x2000, scoped, tag = 'output window, operand 0']
    %15 = vsyncpa [#allocation4], 0
    %s16 = scalar_lea.sflag [#allocation4], 1
    %17 = vsyncpa %s16, 0
    %18 = vsyncpa [#allocation7], 0
    %19 = vsyncpa [#allocation10], 0
    %s20 = scalar_lea.sflag [#allocation10], 1
    %21 = vsyncpa %s20, 0
    %22 = vsyncpa [#allocation13], 0
    %s23 = scalar_lea.sflag [#allocation13], 1
    %24 = vsyncpa %s23, 0
    %25 = vsyncpa [#allocation16], 0
    %s26 = scalar_lea.sflag [#allocation16], 1
    %27 = vsyncpa %s26, 0
    %28 = vsyncpa [#allocation19], 0
    %29 = vsyncpa [#allocation5], 0
    %s30 = scalar_lea.sflag [#allocation5], 1
    %31 = vsyncpa %s30, 0
    loop: start=0, step=1, limit=10
    $region2: #{crossview_forward.1} parent=1 // loop_pre_header
      _
    $region3: #{crossview_forward.1} parent=1 // loop_header
      %s33 = sphi 0, %s37
      %p34 = scmp.ge.s32.totalorder %s33, 10
      %s40 = sphi 0, %s52
      %s41 = sphi 0, %s48
      %s42 = sphi 0, %s40
      %s43 = sphi 0, %s41
      %s44 = sphi 0, %s42
      %s45 = sphi 0, %s43
      %s55 = sphi 0, %s57
      %s58 = sphi 0, %s55
      %s59 = sphi 0, %s58
      %s75 = sphi 0, %s59
      %s79 = sphi 0, %s79
      %s81 = sphi 0, %s79
      %s82 = sphi 0, %s81
      %s96 = sphi 0, %s82
      %s100 = sphi 0, %s100
      %s102 = sphi 0, %s100
      %s103 = sphi 0, %s102
      %s117 = sphi 0, %s103
      %s123 = sphi 0, %s125
      %s126 = sphi 0, %s123
      %s127 = sphi 0, %s126
      %s143 = sphi 0, %s127
      %s149 = sphi 0, %s151
      %s152 = sphi 0, %s149
      %s153 = sphi 0, %s152
      %s169 = sphi 0, %s153
      %s175 = sphi 0, %s177
      %s178 = sphi 0, %s175
      %s179 = sphi 0, %s178
      %s195 = sphi 0, %s179
      %s201 = sphi 0, %s203
      %s204 = sphi 0, %s201
      %s205 = sphi 0, %s204
      %s221 = sphi 0, %s205
      %s227 = sphi 0, %s229
      %s230 = sphi 0, %s227
      %s231 = sphi 0, %s230
      %s247 = sphi 0, %s231
      %s251 = sphi 0, %s251
      %s253 = sphi 0, %s251
      %s254 = sphi 0, %s253
      %s268 = sphi 0, %s254
      %s272 = sphi 0, %s272
      %s274 = sphi 0, %s272
      %s275 = sphi 0, %s274
      %s289 = sphi 0, %s275
      %s295 = sphi 0, %s297
      %s298 = sphi 0, %s295
      %s299 = sphi 0, %s298
      %s315 = sphi 0, %s299
    $region4: #{crossview_forward.1} parent=1 // loop_header_branch
      %36 = sbr.rel (%p34) target = $region8
    $region5: #{crossview_forward.1} parent=1 // loop_body
      %s38 = ssub.s32 %s33, 1
      %s39 = ssub.s32 %s33, 2
      %s46 = sadd.s32 1, %s41
      %p47 = scmp.ge.s32.totalorder %s46, 2
      %s48 = scalar_select %p47, 0, %s46
      %s49 = sadd.s32 1, %s40
      %s50 = scalar_select %p47, %s49, %s40
      %p51 = scmp.ge.s32.totalorder %s50, 4
      %s52 = scalar_select %p51, 0, %s50
      %s53 = ssub.s32 %s40, %s52
      %p54 = scmp.eq.s32.totalorder %s53, 0
      %s56 = sadd.s32 %s55, 1
      %s57 = scalar_select %p54, %s55, %s56
      %p60 = pneg %p54
      %p61 = scmp.eq.s32.totalorder %s33, 7
      %p62 = por %p60, %p61
      %p63 = scmp.ne.s32.totalorder %s55, %s58
      %p64 = scmp.eq.s32.totalorder %s33, 0
      %p65 = por %p63, %p64
      %p66 = scmp.ne.s32.totalorder %s55, %s58
      %p67 = scmp.eq.s32.totalorder %s38, 7
      %p68 = por %p66, %p67
      %p69 = scmp.ne.s32.totalorder %s58, %s59
      %p70 = scmp.eq.s32.totalorder %s38, 0
      %p71 = por %p69, %p70
      %p72 = scmp.ne.s32.totalorder %s58, %s59
      %p73 = scmp.eq.s32.totalorder %s39, 7
      %p74 = por %p72, %p73
      %p76 = scmp.ne.s32.totalorder %s59, %s75
      %p77 = scmp.eq.s32.totalorder %s39, 0
      %p78 = por %p76, %p77
      %s80 = sadd.s32 %s79, 1
      %p83 = scmp.eq.s32.totalorder %s33, 7
      %p84 = scmp.ne.s32.totalorder %s79, %s81
      %p85 = scmp.eq.s32.totalorder %s33, 0
      %p86 = por %p84, %p85
      %p87 = scmp.ne.s32.totalorder %s79, %s81
      %p88 = scmp.eq.s32.totalorder %s38, 7
      %p89 = por %p87, %p88
      %p90 = scmp.ne.s32.totalorder %s81, %s82
      %p91 = scmp.eq.s32.totalorder %s38, 0
      %p92 = por %p90, %p91
      %p93 = scmp.ne.s32.totalorder %s81, %s82
      %p94 = scmp.eq.s32.totalorder %s39, 7
      %p95 = por %p93, %p94
      %p97 = scmp.ne.s32.totalorder %s82, %s96
      %p98 = scmp.eq.s32.totalorder %s39, 0
      %p99 = por %p97, %p98
      %s101 = sadd.s32 %s100, 1
      %p104 = scmp.eq.s32.totalorder %s33, 7
      %p105 = scmp.ne.s32.totalorder %s100, %s102
      %p106 = scmp.eq.s32.totalorder %s33, 0
      %p107 = por %p105, %p106
      %p108 = scmp.ne.s32.totalorder %s100, %s102
      %p109 = scmp.eq.s32.totalorder %s38, 7
      %p110 = por %p108, %p109
      %p111 = scmp.ne.s32.totalorder %s102, %s103
      %p112 = scmp.eq.s32.totalorder %s38, 0
      %p113 = por %p111, %p112
      %p114 = scmp.ne.s32.totalorder %s102, %s103
      %p115 = scmp.eq.s32.totalorder %s39, 7
      %p116 = por %p114, %p115
      %p118 = scmp.ne.s32.totalorder %s103, %s117
      %p119 = scmp.eq.s32.totalorder %s39, 0
      %p120 = por %p118, %p119
      %s121 = ssub.s32 %s41, %s48
      %p122 = scmp.eq.s32.totalorder %s121, 0
      %s124 = sadd.s32 %s123, 1
      %s125 = scalar_select %p122, %s123, %s124
      %p128 = pneg %p122
      %p129 = scmp.eq.s32.totalorder %s33, 7
      %p130 = por %p128, %p129
      %p131 = scmp.ne.s32.totalorder %s123, %s126
      %p132 = scmp.eq.s32.totalorder %s33, 0
      %p133 = por %p131, %p132
      %p134 = scmp.ne.s32.totalorder %s123, %s126
      %p135 = scmp.eq.s32.totalorder %s38, 7
      %p136 = por %p134, %p135
      %p137 = scmp.ne.s32.totalorder %s126, %s127
      %p138 = scmp.eq.s32.totalorder %s38, 0
      %p139 = por %p137, %p138
      %p140 = scmp.ne.s32.totalorder %s126, %s127
      %p141 = scmp.eq.s32.totalorder %s39, 7
      %p142 = por %p140, %p141
      %p144 = scmp.ne.s32.totalorder %s127, %s143
      %p145 = scmp.eq.s32.totalorder %s39, 0
      %p146 = por %p144, %p145
      %s147 = ssub.s32 %s41, %s48
      %p148 = scmp.eq.s32.totalorder %s147, 0
      %s150 = sadd.s32 %s149, 1
      %s151 = scalar_select %p148, %s149, %s150
      %p154 = pneg %p148
      %p155 = scmp.eq.s32.totalorder %s33, 7
      %p156 = por %p154, %p155
      %p157 = scmp.ne.s32.totalorder %s149, %s152
      %p158 = scmp.eq.s32.totalorder %s33, 0
      %p159 = por %p157, %p158
      %p160 = scmp.ne.s32.totalorder %s149, %s152
      %p161 = scmp.eq.s32.totalorder %s38, 7
      %p162 = por %p160, %p161
      %p163 = scmp.ne.s32.totalorder %s152, %s153
      %p164 = scmp.eq.s32.totalorder %s38, 0
      %p165 = por %p163, %p164
      %p166 = scmp.ne.s32.totalorder %s152, %s153
      %p167 = scmp.eq.s32.totalorder %s39, 7
      %p168 = por %p166, %p167
      %p170 = scmp.ne.s32.totalorder %s153, %s169
      %p171 = scmp.eq.s32.totalorder %s39, 0
      %p172 = por %p170, %p171
      %s173 = ssub.s32 %s41, %s48
      %p174 = scmp.eq.s32.totalorder %s173, 0
      %s176 = sadd.s32 %s175, 1
      %s177 = scalar_select %p174, %s175, %s176
      %p180 = pneg %p174
      %p181 = scmp.eq.s32.totalorder %s33, 7
      %p182 = por %p180, %p181
      %p183 = scmp.ne.s32.totalorder %s175, %s178
      %p184 = scmp.eq.s32.totalorder %s33, 0
      %p185 = por %p183, %p184
      %p186 = scmp.ne.s32.totalorder %s175, %s178
      %p187 = scmp.eq.s32.totalorder %s38, 7
      %p188 = por %p186, %p187
      %p189 = scmp.ne.s32.totalorder %s178, %s179
      %p190 = scmp.eq.s32.totalorder %s38, 0
      %p191 = por %p189, %p190
      %p192 = scmp.ne.s32.totalorder %s178, %s179
      %p193 = scmp.eq.s32.totalorder %s39, 7
      %p194 = por %p192, %p193
      %p196 = scmp.ne.s32.totalorder %s179, %s195
      %p197 = scmp.eq.s32.totalorder %s39, 0
      %p198 = por %p196, %p197
      %s199 = ssub.s32 %s41, %s48
      %p200 = scmp.eq.s32.totalorder %s199, 0
      %s202 = sadd.s32 %s201, 1
      %s203 = scalar_select %p200, %s201, %s202
      %p206 = pneg %p200
      %p207 = scmp.eq.s32.totalorder %s33, 7
      %p208 = por %p206, %p207
      %p209 = scmp.ne.s32.totalorder %s201, %s204
      %p210 = scmp.eq.s32.totalorder %s33, 0
      %p211 = por %p209, %p210
      %p212 = scmp.ne.s32.totalorder %s201, %s204
      %p213 = scmp.eq.s32.totalorder %s38, 7
      %p214 = por %p212, %p213
      %p215 = scmp.ne.s32.totalorder %s204, %s205
      %p216 = scmp.eq.s32.totalorder %s38, 0
      %p217 = por %p215, %p216
      %p218 = scmp.ne.s32.totalorder %s204, %s205
      %p219 = scmp.eq.s32.totalorder %s39, 7
      %p220 = por %p218, %p219
      %p222 = scmp.ne.s32.totalorder %s205, %s221
      %p223 = scmp.eq.s32.totalorder %s39, 0
      %p224 = por %p222, %p223
      %s225 = ssub.s32 %s41, %s48
      %p226 = scmp.eq.s32.totalorder %s225, 0
      %s228 = sadd.s32 %s227, 1
      %s229 = scalar_select %p226, %s227, %s228
      %p232 = pneg %p226
      %p233 = scmp.eq.s32.totalorder %s33, 7
      %p234 = por %p232, %p233
      %p235 = scmp.ne.s32.totalorder %s227, %s230
      %p236 = scmp.eq.s32.totalorder %s33, 0
      %p237 = por %p235, %p236
      %p238 = scmp.ne.s32.totalorder %s227, %s230
      %p239 = scmp.eq.s32.totalorder %s38, 7
      %p240 = por %p238, %p239
      %p241 = scmp.ne.s32.totalorder %s230, %s231
      %p242 = scmp.eq.s32.totalorder %s38, 0
      %p243 = por %p241, %p242
      %p244 = scmp.ne.s32.totalorder %s230, %s231
      %p245 = scmp.eq.s32.totalorder %s39, 7
      %p246 = por %p244, %p245
      %p248 = scmp.ne.s32.totalorder %s231, %s247
      %p249 = scmp.eq.s32.totalorder %s39, 0
      %p250 = por %p248, %p249
      %s252 = sadd.s32 %s251, 1
      %p255 = scmp.eq.s32.totalorder %s33, 7
      %p256 = scmp.ne.s32.totalorder %s251, %s253
      %p257 = scmp.eq.s32.totalorder %s33, 0
      %p258 = por %p256, %p257
      %p259 = scmp.ne.s32.totalorder %s251, %s253
      %p260 = scmp.eq.s32.totalorder %s38, 7
      %p261 = por %p259, %p260
      %p262 = scmp.ne.s32.totalorder %s253, %s254
      %p263 = scmp.eq.s32.totalorder %s38, 0
      %p264 = por %p262, %p263
      %p265 = scmp.ne.s32.totalorder %s253, %s254
      %p266 = scmp.eq.s32.totalorder %s39, 7
      %p267 = por %p265, %p266
      %p269 = scmp.ne.s32.totalorder %s254, %s268
      %p270 = scmp.eq.s32.totalorder %s39, 0
      %p271 = por %p269, %p270
      %s273 = sadd.s32 %s272, 1
      %p276 = scmp.eq.s32.totalorder %s33, 7
      %p277 = scmp.ne.s32.totalorder %s272, %s274
      %p278 = scmp.eq.s32.totalorder %s33, 0
      %p279 = por %p277, %p278
      %p280 = scmp.ne.s32.totalorder %s272, %s274
      %p281 = scmp.eq.s32.totalorder %s38, 7
      %p282 = por %p280, %p281
      %p283 = scmp.ne.s32.totalorder %s274, %s275
      %p284 = scmp.eq.s32.totalorder %s38, 0
      %p285 = por %p283, %p284
      %p286 = scmp.ne.s32.totalorder %s274, %s275
      %p287 = scmp.eq.s32.totalorder %s39, 7
      %p288 = por %p286, %p287
      %p290 = scmp.ne.s32.totalorder %s275, %s289
      %p291 = scmp.eq.s32.totalorder %s39, 0
      %p292 = por %p290, %p291
      %s293 = ssub.s32 %s40, %s52
      %p294 = scmp.eq.s32.totalorder %s293, 0
      %s296 = sadd.s32 %s295, 1
      %s297 = scalar_select %p294, %s295, %s296
      %p300 = pneg %p294
      %p301 = scmp.eq.s32.totalorder %s33, 7
      %p302 = por %p300, %p301
      %p303 = scmp.ne.s32.totalorder %s295, %s298
      %p304 = scmp.eq.s32.totalorder %s33, 0
      %p305 = por %p303, %p304
      %p306 = scmp.ne.s32.totalorder %s295, %s298
      %p307 = scmp.eq.s32.totalorder %s38, 7
      %p308 = por %p306, %p307
      %p309 = scmp.ne.s32.totalorder %s298, %s299
      %p310 = scmp.eq.s32.totalorder %s38, 0
      %p311 = por %p309, %p310
      %p312 = scmp.ne.s32.totalorder %s298, %s299
      %p313 = scmp.eq.s32.totalorder %s39, 7
      %p314 = por %p312, %p313
      %p316 = scmp.ne.s32.totalorder %s299, %s315
      %p317 = scmp.eq.s32.totalorder %s39, 0
      %p318 = por %p316, %p317
      %p319 = scmp.le.s32.totalorder 1, %s33
      %p320 = scmp.lt.s32.totalorder %s33, 9
      %p321 = pnand %p319, %p320
      %p322 = pneg %p321
      // Predicated region
      $region9: #{crossview_forward.1} parent=5 // pred_check
        _
      $region10: #{crossview_forward.1} parent=5 // pred_check_branch
        %324 = sbr.rel (%p321) target = $region12
      $region11: #{crossview_forward.1} parent=5 // pred_region
        %s325 = ssub.s32 %s33, 1
        // Predicated region
        $region13: #{crossview_forward.1} parent=11 // pred_check
          %p326 = pneg %p92
        $region14: #{crossview_forward.1} parent=11 // pred_check_branch
          %328 = sbr.rel (%p326) target = $region16
        $region15: #{crossview_forward.1} parent=11 // pred_region
          %s330 = ssub.s32 128, 128
          %331 = vsyncadd [#allocation7], %s330
          %s333 = sshll.u32 [#allocation6], 4
          %s334 = int_to_ptr.vmem [resolvable:$true] %s333
          %336 = dma.hbm_to_vmem [thread:$0]  %s1, 128, %s334, [#allocation7]
        $region16: #{crossview_forward.1} parent=11 // pred_fallthru
          _
        // Predicated region
        $region17: #{crossview_forward.1} parent=11 // pred_check
          %p337 = pneg %p113
        $region18: #{crossview_forward.1} parent=11 // pred_check_branch
          %339 = sbr.rel (%p337) target = $region20
        $region19: #{crossview_forward.1} parent=11 // pred_region
          %s341 = ssub.s32 5120, 5120
          %342 = vsyncadd [#allocation7], %s341
          %s343 = sshll.u32 [#allocation8], 4
          %s344 = int_to_ptr.vmem [resolvable:$true] %s343
          %349 = dma.hbm_to_vmem [thread:$0]  %s2, 5120, %s344, [#allocation7], 64, 64, 4
        $region20: #{crossview_forward.1} parent=11 // pred_fallthru
          _
        // Predicated region
        $region21: #{crossview_forward.1} parent=11 // pred_check
          %p350 = pneg %p264
        $region22: #{crossview_forward.1} parent=11 // pred_check_branch
          %352 = sbr.rel (%p350) target = $region24
        $region23: #{crossview_forward.1} parent=11 // pred_region
          %s354 = ssub.s32 16, 16
          %355 = vsyncadd [#allocation16], %s354
          %s357 = sshll.u32 [#allocation17], 4
          %s358 = int_to_ptr.vmem [resolvable:$true] %s357
          %360 = dma.hbm_to_vmem [thread:$0]  %s8, 16, %s358, [#allocation16]
        $region24: #{crossview_forward.1} parent=11 // pred_fallthru
          _
        // Predicated region
        $region25: #{crossview_forward.1} parent=11 // pred_check
          %p361 = pneg %p285
        $region26: #{crossview_forward.1} parent=11 // pred_check_branch
          %363 = sbr.rel (%p361) target = $region28
        $region27: #{crossview_forward.1} parent=11 // pred_region
          %s365 = ssub.s32 16, 16
          %366 = vsyncadd [#allocation19], %s365
          %s368 = sshll.u32 [#allocation18], 4
          %s369 = int_to_ptr.vmem [resolvable:$true] %s368
          %371 = dma.hbm_to_vmem [thread:$0]  %s9, 16, %s369, [#allocation19]
        $region28: #{crossview_forward.1} parent=11 // pred_fallthru
          _
      $region12: #{crossview_forward.1} parent=5 // pred_fallthru
        _
      %p372 = scmp.lt.s32.totalorder %s33, 8
      // Predicated region
      $region29: #{crossview_forward.1} parent=5 // pred_check
        %p373 = pneg %p372
      $region30: #{crossview_forward.1} parent=5 // pred_check_branch
        %375 = sbr.rel (%p373) target = $region32
      $region31: #{crossview_forward.1} parent=5 // pred_region
        // Predicated region
        $region33: #{crossview_forward.1} parent=31 // pred_check
          %p376 = pneg %p65
        $region34: #{crossview_forward.1} parent=31 // pred_check_branch
          %378 = sbr.rel (%p376) target = $region36
        $region35: #{crossview_forward.1} parent=31 // pred_region
          %s379 = sand.u32 %s55, 1
          %s380 = scalar_lea.sflag [#allocation4], %s379
          %s381 = sand.u32 %s55, 1
          %s382 = smul.addr %s381, 40
          %s383 = scalar_lea.vmem [#allocation3], %s382
          %s385 = ssub.s32 640, 640
          %386 = vsyncadd %s380, %s385
          %s387 = smul.addr %s40, 5
          %s388 = smul.addr %s387, 128
          %s389 = scalar_lea.hbm %s0, %s388
          %s391 = sshll.u32 %s383, 4
          %s392 = int_to_ptr.vmem [resolvable:$true] %s391
          %394 = dma.hbm_to_vmem [thread:$0]  %s389, 640, %s392, %s380
        $region36: #{crossview_forward.1} parent=31 // pred_fallthru
          _
        // Predicated region
        $region37: #{crossview_forward.1} parent=31 // pred_check
          %p395 = pneg %p133
        $region38: #{crossview_forward.1} parent=31 // pred_check_branch
          %397 = sbr.rel (%p395) target = $region40
        $region39: #{crossview_forward.1} parent=31 // pred_region
          %s398 = sand.u32 %s33, 1
          %s399 = scalar_lea.sflag [#allocation10], %s398
          %s400 = sand.u32 %s123, 1
          %s401 = smul.addr %s400, 16
          %s402 = scalar_lea.vmem [#allocation9], %s401
          %s404 = ssub.s32 256, 256
          %405 = vsyncadd %s399, %s404
          %s406 = smul.addr %s41, 2
          %s407 = smul.addr %s406, 128
          %s408 = scalar_lea.hbm %s3, %s407
          %s409 = sshll.u32 %s402, 4
          %s410 = int_to_ptr.vmem [resolvable:$true] %s409
          %415 = dma.hbm_to_vmem [thread:$0]  %s408, 256, %s410, %s399, 128, 128, 8
        $region40: #{crossview_forward.1} parent=31 // pred_fallthru
          _
        // Predicated region
        $region41: #{crossview_forward.1} parent=31 // pred_check
          %p416 = pneg %p159
        $region42: #{crossview_forward.1} parent=31 // pred_check_branch
          %418 = sbr.rel (%p416) target = $region44
        $region43: #{crossview_forward.1} parent=31 // pred_region
          %s419 = sand.u32 %s33, 1
          %s420 = scalar_lea.sflag [#allocation10], %s419
          %s421 = sand.u32 %s149, 1
          %s422 = smul.addr %s421, 16
          %s423 = scalar_lea.vmem [#allocation11], %s422
          %s425 = ssub.s32 256, 256
          %426 = vsyncadd %s420, %s425
          %s427 = smul.addr %s41, 4
          %s428 = smul.addr %s427, 64
          %s429 = scalar_lea.hbm %s4, %s428
          %s430 = sshll.u32 %s423, 4
          %s431 = int_to_ptr.vmem [resolvable:$true] %s430
          %436 = dma.hbm_to_vmem [thread:$0]  %s429, 256, %s431, %s420, 64, 64, 4
        $region44: #{crossview_forward.1} parent=31 // pred_fallthru
          _
        // Predicated region
        $region45: #{crossview_forward.1} parent=31 // pred_check
          %p437 = pneg %p185
        $region46: #{crossview_forward.1} parent=31 // pred_check_branch
          %439 = sbr.rel (%p437) target = $region48
        $region47: #{crossview_forward.1} parent=31 // pred_region
          %s440 = sand.u32 %s33, 1
          %s441 = scalar_lea.sflag [#allocation13], %s440
          %s442 = sand.u32 %s175, 1
          %s443 = smul.addr %s442, 16
          %s444 = scalar_lea.vmem [#allocation12], %s443
          %s446 = ssub.s32 256, 256
          %447 = vsyncadd %s441, %s446
          %s448 = smul.addr %s41, 4
          %s449 = smul.addr %s448, 64
          %s450 = scalar_lea.hbm %s5, %s449
          %s451 = sshll.u32 %s444, 4
          %s452 = int_to_ptr.vmem [resolvable:$true] %s451
          %457 = dma.hbm_to_vmem [thread:$0]  %s450, 256, %s452, %s441, 64, 64, 4
        $region48: #{crossview_forward.1} parent=31 // pred_fallthru
          _
        // Predicated region
        $region49: #{crossview_forward.1} parent=31 // pred_check
          %p458 = pneg %p211
        $region50: #{crossview_forward.1} parent=31 // pred_check_branch
          %460 = sbr.rel (%p458) target = $region52
        $region51: #{crossview_forward.1} parent=31 // pred_region
          %s461 = sand.u32 %s33, 1
          %s462 = scalar_lea.sflag [#allocation13], %s461
          %s463 = sand.u32 %s201, 1
          %s464 = smul.addr %s463, 16
          %s465 = scalar_lea.vmem [#allocation14], %s464
          %s467 = ssub.s32 256, 256
          %468 = vsyncadd %s462, %s467
          %s469 = smul.addr %s41, 4
          %s470 = smul.addr %s469, 64
          %s471 = scalar_lea.hbm %s6, %s470
          %s472 = sshll.u32 %s465, 4
          %s473 = int_to_ptr.vmem [resolvable:$true] %s472
          %478 = dma.hbm_to_vmem [thread:$0]  %s471, 256, %s473, %s462, 64, 64, 4
        $region52: #{crossview_forward.1} parent=31 // pred_fallthru
          _
        // Predicated region
        $region53: #{crossview_forward.1} parent=31 // pred_check
          %p479 = pneg %p237
        $region54: #{crossview_forward.1} parent=31 // pred_check_branch
          %481 = sbr.rel (%p479) target = $region56
        $region55: #{crossview_forward.1} parent=31 // pred_region
          %s482 = sand.u32 %s33, 1
          %s483 = scalar_lea.sflag [#allocation16], %s482
          %s484 = sand.u32 %s227, 1
          %s485 = smul.addr %s484, 64
          %s486 = scalar_lea.vmem [#allocation15], %s485
          %s488 = ssub.s32 1024, 1024
          %489 = vsyncadd %s483, %s488
          %s490 = smul.addr %s41, 16
          %s491 = smul.addr %s490, 64
          %s492 = scalar_lea.hbm %s7, %s491
          %s493 = sshll.u32 %s486, 4
          %s494 = int_to_ptr.vmem [resolvable:$true] %s493
          %499 = dma.hbm_to_vmem [thread:$0]  %s492, 1024, %s494, %s483, 64, 64, 4
        $region56: #{crossview_forward.1} parent=31 // pred_fallthru
          _
      $region32: #{crossview_forward.1} parent=5 // pred_fallthru
        _
      %p500 = scmp.le.s32.totalorder 1, %s33
      %p501 = scmp.lt.s32.totalorder %s33, 9
      %p502 = pnand %p500, %p501
      %p503 = pneg %p502
      // Predicated region
      $region57: #{crossview_forward.1} parent=5 // pred_check
        _
      $region58: #{crossview_forward.1} parent=5 // pred_check_branch
        %505 = sbr.rel (%p502) target = $region60
      $region59: #{crossview_forward.1} parent=5 // pred_region
        %s506 = ssub.s32 %s33, 1
        %s507 = sand.u32 %s58, 1
        %s508 = scalar_lea.sflag [#allocation4], %s507
        %s509 = sand.u32 %s58, 1
        %s510 = smul.addr %s509, 40
        %s511 = scalar_lea.vmem [#allocation3], %s510
        // Predicated region
        $region61: #{crossview_forward.1} parent=59 // pred_check
          %p512 = pneg %p71
        $region62: #{crossview_forward.1} parent=59 // pred_check_branch
          %514 = sbr.rel (%p512) target = $region64
        $region63: #{crossview_forward.1} parent=59 // pred_region
          %515 = dma.done %s508, 640
        $region64: #{crossview_forward.1} parent=59 // pred_fallthru
          _
        // Predicated region
        $region65: #{crossview_forward.1} parent=59 // pred_check
          %p516 = pneg %p92
        $region66: #{crossview_forward.1} parent=59 // pred_check_branch
          %518 = sbr.rel (%p516) target = $region68
        $region67: #{crossview_forward.1} parent=59 // pred_region
          %519 = dma.done [#allocation7], 128
        $region68: #{crossview_forward.1} parent=59 // pred_fallthru
          _
        // Predicated region
        $region69: #{crossview_forward.1} parent=59 // pred_check
          %p520 = pneg %p113
        $region70: #{crossview_forward.1} parent=59 // pred_check_branch
          %522 = sbr.rel (%p520) target = $region72
        $region71: #{crossview_forward.1} parent=59 // pred_region
          %523 = dma.done [#allocation7], 5120
        $region72: #{crossview_forward.1} parent=59 // pred_fallthru
          _
        %s524 = sand.u32 %s38, 1
        %s525 = scalar_lea.sflag [#allocation10], %s524
        %s526 = sand.u32 %s126, 1
        %s527 = smul.addr %s526, 16
        %s528 = scalar_lea.vmem [#allocation9], %s527
        // Predicated region
        $region73: #{crossview_forward.1} parent=59 // pred_check
          %p529 = pneg %p139
        $region74: #{crossview_forward.1} parent=59 // pred_check_branch
          %531 = sbr.rel (%p529) target = $region76
        $region75: #{crossview_forward.1} parent=59 // pred_region
          %532 = dma.done %s525, 256
        $region76: #{crossview_forward.1} parent=59 // pred_fallthru
          _
        %s533 = sand.u32 %s38, 1
        %s534 = scalar_lea.sflag [#allocation10], %s533
        %s535 = sand.u32 %s152, 1
        %s536 = smul.addr %s535, 16
        %s537 = scalar_lea.vmem [#allocation11], %s536
        // Predicated region
        $region77: #{crossview_forward.1} parent=59 // pred_check
          %p538 = pneg %p165
        $region78: #{crossview_forward.1} parent=59 // pred_check_branch
          %540 = sbr.rel (%p538) target = $region80
        $region79: #{crossview_forward.1} parent=59 // pred_region
          %541 = dma.done %s534, 256
        $region80: #{crossview_forward.1} parent=59 // pred_fallthru
          _
        %s542 = sand.u32 %s38, 1
        %s543 = scalar_lea.sflag [#allocation13], %s542
        %s544 = sand.u32 %s178, 1
        %s545 = smul.addr %s544, 16
        %s546 = scalar_lea.vmem [#allocation12], %s545
        // Predicated region
        $region81: #{crossview_forward.1} parent=59 // pred_check
          %p547 = pneg %p191
        $region82: #{crossview_forward.1} parent=59 // pred_check_branch
          %549 = sbr.rel (%p547) target = $region84
        $region83: #{crossview_forward.1} parent=59 // pred_region
          %550 = dma.done %s543, 256
        $region84: #{crossview_forward.1} parent=59 // pred_fallthru
          _
        %s551 = sand.u32 %s38, 1
        %s552 = scalar_lea.sflag [#allocation13], %s551
        %s553 = sand.u32 %s204, 1
        %s554 = smul.addr %s553, 16
        %s555 = scalar_lea.vmem [#allocation14], %s554
        // Predicated region
        $region85: #{crossview_forward.1} parent=59 // pred_check
          %p556 = pneg %p217
        $region86: #{crossview_forward.1} parent=59 // pred_check_branch
          %558 = sbr.rel (%p556) target = $region88
        $region87: #{crossview_forward.1} parent=59 // pred_region
          %559 = dma.done %s552, 256
        $region88: #{crossview_forward.1} parent=59 // pred_fallthru
          _
        %s560 = sand.u32 %s38, 1
        %s561 = scalar_lea.sflag [#allocation16], %s560
        %s562 = sand.u32 %s230, 1
        %s563 = smul.addr %s562, 64
        %s564 = scalar_lea.vmem [#allocation15], %s563
        // Predicated region
        $region89: #{crossview_forward.1} parent=59 // pred_check
          %p565 = pneg %p243
        $region90: #{crossview_forward.1} parent=59 // pred_check_branch
          %567 = sbr.rel (%p565) target = $region92
        $region91: #{crossview_forward.1} parent=59 // pred_region
          %568 = dma.done %s561, 1024
        $region92: #{crossview_forward.1} parent=59 // pred_fallthru
          _
        // Predicated region
        $region93: #{crossview_forward.1} parent=59 // pred_check
          %p569 = pneg %p264
        $region94: #{crossview_forward.1} parent=59 // pred_check_branch
          %571 = sbr.rel (%p569) target = $region96
        $region95: #{crossview_forward.1} parent=59 // pred_region
          %572 = dma.done [#allocation16], 16
        $region96: #{crossview_forward.1} parent=59 // pred_fallthru
          _
        // Predicated region
        $region97: #{crossview_forward.1} parent=59 // pred_check
          %p573 = pneg %p285
        $region98: #{crossview_forward.1} parent=59 // pred_check_branch
          %575 = sbr.rel (%p573) target = $region100
        $region99: #{crossview_forward.1} parent=59 // pred_region
          %576 = dma.done [#allocation19], 16
        $region100: #{crossview_forward.1} parent=59 // pred_fallthru
          _
        %s577 = sand.u32 %s58, 1
        %s578 = scalar_lea.sflag [#allocation4], %s577
        %s579 = sand.u32 %s58, 1
        %s580 = smul.addr %s579, 40
        %s581 = scalar_lea.vmem [#allocation3], %s580
        %p582 = pneg %p71
        %p583 = pneg %p68
        %p584 = pneg %p92
        %p585 = pneg %p89
        %p586 = pneg %p113
        %p587 = pneg %p110
        %s588 = sand.u32 %s38, 1
        %s589 = scalar_lea.sflag [#allocation10], %s588
        %s590 = sand.u32 %s126, 1
        %s591 = smul.addr %s590, 16
        %s592 = scalar_lea.vmem [#allocation9], %s591
        %p593 = pneg %p139
        %p594 = pneg %p136
        %s595 = sand.u32 %s38, 1
        %s596 = scalar_lea.sflag [#allocation10], %s595
        %s597 = sand.u32 %s152, 1
        %s598 = smul.addr %s597, 16
        %s599 = scalar_lea.vmem [#allocation11], %s598
        %p600 = pneg %p165
        %p601 = pneg %p162
        %s602 = sand.u32 %s38, 1
        %s603 = scalar_lea.sflag [#allocation13], %s602
        %s604 = sand.u32 %s178, 1
        %s605 = smul.addr %s604, 16
        %s606 = scalar_lea.vmem [#allocation12], %s605
        %p607 = pneg %p191
        %p608 = pneg %p188
        %s609 = sand.u32 %s38, 1
        %s610 = scalar_lea.sflag [#allocation13], %s609
        %s611 = sand.u32 %s204, 1
        %s612 = smul.addr %s611, 16
        %s613 = scalar_lea.vmem [#allocation14], %s612
        %p614 = pneg %p217
        %p615 = pneg %p214
        %s616 = sand.u32 %s38, 1
        %s617 = scalar_lea.sflag [#allocation16], %s616
        %s618 = sand.u32 %s230, 1
        %s619 = smul.addr %s618, 64
        %s620 = scalar_lea.vmem [#allocation15], %s619
        %p621 = pneg %p243
        %p622 = pneg %p240
        %p623 = pneg %p264
        %p624 = pneg %p261
        %p625 = pneg %p285
        %p626 = pneg %p282
        %p627 = pneg %p311
        %p628 = pneg %p308
        %s629 = sand.u32 %s298, 1
        %s630 = scalar_lea.sflag [#allocation5], %s629
        %s631 = sand.u32 %s298, 1
        %s632 = smul.addr %s631, 8
        %s633 = scalar_lea.vmem [#allocation20], %s632
        %p635 = scmp.eq.s32.totalorder %s43, 0
        // Predicated region
        $region101: #{crossview_forward.1} parent=59 // pred_check
          %p636 = pneg %p635
        $region102: #{crossview_forward.1} parent=59 // pred_check_branch
          %638 = sbr.rel (%p636) target = $region104
        $region103: #{crossview_forward.1} parent=59 // pred_region
          %v639 = vld [vmem:[%s511] sm:$0xff]
          %v640 = vld [vmem:[%s511 + $0x8] sm:$0xff]
          %v641 = vld [vmem:[%s511 + $0x10] sm:$0xff]
          %v642 = vld [vmem:[%s511 + $0x18] sm:$0xff]
          %v643 = vld [vmem:[%s511 + $0x20] sm:$0xff]
          %v644 = vpack.c.bf16 %v639, %v639
          %v645 = vpack.c.bf16 %v640, %v640
          %v646 = vpack.c.bf16 %v641, %v641
          %v647 = vpack.c.bf16 %v642, %v642
          %v648 = vpack.c.bf16 %v643, %v643
          %v649 = vld [vmem:[#allocation8] sm:$0xf]
          %v650 = vld [vmem:[#allocation8 + $0x4] sm:$0xf]
          %v651 = vld [vmem:[#allocation8 + $0x8] sm:$0xf]
          %v652 = vld [vmem:[#allocation8 + $0xc] sm:$0xf]
          %v653 = vld [vmem:[#allocation8 + $0x10] sm:$0xf]
          %v654 = vld [vmem:[#allocation8 + $0x14] sm:$0xf]
          %v655 = vld [vmem:[#allocation8 + $0x18] sm:$0xf]
          %v656 = vld [vmem:[#allocation8 + $0x1c] sm:$0xf]
          %v657 = vld [vmem:[#allocation8 + $0x20] sm:$0xf]
          %v658 = vld [vmem:[#allocation8 + $0x24] sm:$0xf]
          %v659 = vld [vmem:[#allocation8 + $0x28] sm:$0xf]
          %v660 = vld [vmem:[#allocation8 + $0x2c] sm:$0xf]
          %v661 = vld [vmem:[#allocation8 + $0x30] sm:$0xf]
          %v662 = vld [vmem:[#allocation8 + $0x34] sm:$0xf]
          %v663 = vld [vmem:[#allocation8 + $0x38] sm:$0xf]
          %v664 = vld [vmem:[#allocation8 + $0x3c] sm:$0xf]
          %v665 = vld [vmem:[#allocation8 + $0x40] sm:$0xf]
          %v666 = vld [vmem:[#allocation8 + $0x44] sm:$0xf]
          %v667 = vld [vmem:[#allocation8 + $0x48] sm:$0xf]
          %v668 = vld [vmem:[#allocation8 + $0x4c] sm:$0xf]
          %v669 = vld [vmem:[#allocation8 + $0x50] sm:$0xf]
          %v670 = vld [vmem:[#allocation8 + $0x54] sm:$0xf]
          %v671 = vld [vmem:[#allocation8 + $0x58] sm:$0xf]
          %v672 = vld [vmem:[#allocation8 + $0x5c] sm:$0xf]
          %v673 = vld [vmem:[#allocation8 + $0x60] sm:$0xf]
          %v674 = vld [vmem:[#allocation8 + $0x64] sm:$0xf]
          %v675 = vld [vmem:[#allocation8 + $0x68] sm:$0xf]
          %v676 = vld [vmem:[#allocation8 + $0x6c] sm:$0xf]
          %v677 = vld [vmem:[#allocation8 + $0x70] sm:$0xf]
          %v678 = vld [vmem:[#allocation8 + $0x74] sm:$0xf]
          %v679 = vld [vmem:[#allocation8 + $0x78] sm:$0xf]
          %v680 = vld [vmem:[#allocation8 + $0x7c] sm:$0xf]
          %v681 = vld [vmem:[#allocation8 + $0x80] sm:$0xf]
          %v682 = vld [vmem:[#allocation8 + $0x84] sm:$0xf]
          %v683 = vld [vmem:[#allocation8 + $0x88] sm:$0xf]
          %v684 = vld [vmem:[#allocation8 + $0x8c] sm:$0xf]
          %v685 = vld [vmem:[#allocation8 + $0x90] sm:$0xf]
          %v686 = vld [vmem:[#allocation8 + $0x94] sm:$0xf]
          %v687 = vld [vmem:[#allocation8 + $0x98] sm:$0xf]
          %v688 = vld [vmem:[#allocation8 + $0x9c] sm:$0xf]
          %v689 = vld [vmem:[#allocation8 + $0xa0] sm:$0xf]
          %v690 = vld [vmem:[#allocation8 + $0xa4] sm:$0xf]
          %v691 = vld [vmem:[#allocation8 + $0xa8] sm:$0xf]
          %v692 = vld [vmem:[#allocation8 + $0xac] sm:$0xf]
          %v693 = vld [vmem:[#allocation8 + $0xb0] sm:$0xf]
          %v694 = vld [vmem:[#allocation8 + $0xb4] sm:$0xf]
          %v695 = vld [vmem:[#allocation8 + $0xb8] sm:$0xf]
          %v696 = vld [vmem:[#allocation8 + $0xbc] sm:$0xf]
          %v697 = vld [vmem:[#allocation8 + $0xc0] sm:$0xf]
          %v698 = vld [vmem:[#allocation8 + $0xc4] sm:$0xf]
          %v699 = vld [vmem:[#allocation8 + $0xc8] sm:$0xf]
          %v700 = vld [vmem:[#allocation8 + $0xcc] sm:$0xf]
          %v701 = vld [vmem:[#allocation8 + $0xd0] sm:$0xf]
          %v702 = vld [vmem:[#allocation8 + $0xd4] sm:$0xf]
          %v703 = vld [vmem:[#allocation8 + $0xd8] sm:$0xf]
          %v704 = vld [vmem:[#allocation8 + $0xdc] sm:$0xf]
          %v705 = vld [vmem:[#allocation8 + $0xe0] sm:$0xf]
          %v706 = vld [vmem:[#allocation8 + $0xe4] sm:$0xf]
          %v707 = vld [vmem:[#allocation8 + $0xe8] sm:$0xf]
          %v708 = vld [vmem:[#allocation8 + $0xec] sm:$0xf]
          %v709 = vld [vmem:[#allocation8 + $0xf0] sm:$0xf]
          %v710 = vld [vmem:[#allocation8 + $0xf4] sm:$0xf]
          %v711 = vld [vmem:[#allocation8 + $0xf8] sm:$0xf]
          %v712 = vld [vmem:[#allocation8 + $0xfc] sm:$0xf]
          %v713 = vld [vmem:[#allocation8 + $0x100] sm:$0xf]
          %v714 = vld [vmem:[#allocation8 + $0x104] sm:$0xf]
          %v715 = vld [vmem:[#allocation8 + $0x108] sm:$0xf]
          %v716 = vld [vmem:[#allocation8 + $0x10c] sm:$0xf]
          %v717 = vld [vmem:[#allocation8 + $0x110] sm:$0xf]
          %v718 = vld [vmem:[#allocation8 + $0x114] sm:$0xf]
          %v719 = vld [vmem:[#allocation8 + $0x118] sm:$0xf]
          %v720 = vld [vmem:[#allocation8 + $0x11c] sm:$0xf]
          %v721 = vld [vmem:[#allocation8 + $0x120] sm:$0xf]
          %v722 = vld [vmem:[#allocation8 + $0x124] sm:$0xf]
          %v723 = vld [vmem:[#allocation8 + $0x128] sm:$0xf]
          %v724 = vld [vmem:[#allocation8 + $0x12c] sm:$0xf]
          %v725 = vld [vmem:[#allocation8 + $0x130] sm:$0xf]
          %v726 = vld [vmem:[#allocation8 + $0x134] sm:$0xf]
          %v727 = vld [vmem:[#allocation8 + $0x138] sm:$0xf]
          %v728 = vld [vmem:[#allocation8 + $0x13c] sm:$0xf]
          %v729 = vld [vmem:[#allocation6] sm:$0xff]
          %v810 = vunpack.c.l.b16 %v649
          %v811 = vunpack.c.l.b16 %v650
          %v812 = vunpack.c.l.b16 %v651
          %v813 = vunpack.c.l.b16 %v652
          %v814 = vunpack.c.l.b16 %v653
          %v815 = vunpack.c.l.b16 %v654
          %v816 = vunpack.c.l.b16 %v655
          %v817 = vunpack.c.l.b16 %v656
          %v818 = vunpack.c.l.b16 %v657
          %v819 = vunpack.c.l.b16 %v658
          %v820 = vunpack.c.l.b16 %v659
          %v821 = vunpack.c.l.b16 %v660
          %v822 = vunpack.c.l.b16 %v661
          %v823 = vunpack.c.l.b16 %v662
          %v824 = vunpack.c.l.b16 %v663
          %v825 = vunpack.c.l.b16 %v664
          %v826 = vunpack.c.l.b16 %v665
          %v827 = vunpack.c.l.b16 %v666
          %v828 = vunpack.c.l.b16 %v667
          %v829 = vunpack.c.l.b16 %v668
          %v830 = vunpack.c.l.b16 %v669
          %v831 = vunpack.c.l.b16 %v670
          %v832 = vunpack.c.l.b16 %v671
          %v833 = vunpack.c.l.b16 %v672
          %v834 = vunpack.c.l.b16 %v673
          %v835 = vunpack.c.l.b16 %v674
          %v836 = vunpack.c.l.b16 %v675
          %v837 = vunpack.c.l.b16 %v676
          %v838 = vunpack.c.l.b16 %v677
          %v839 = vunpack.c.l.b16 %v678
          %v840 = vunpack.c.l.b16 %v679
          %v841 = vunpack.c.l.b16 %v680
          %v842 = vunpack.c.l.b16 %v681
          %v843 = vunpack.c.l.b16 %v682
          %v844 = vunpack.c.l.b16 %v683
          %v845 = vunpack.c.l.b16 %v684
          %v846 = vunpack.c.l.b16 %v685
          %v847 = vunpack.c.l.b16 %v686
          %v848 = vunpack.c.l.b16 %v687
          %v849 = vunpack.c.l.b16 %v688
          %v850 = vunpack.c.l.b16 %v689
          %v851 = vunpack.c.l.b16 %v690
          %v852 = vunpack.c.l.b16 %v691
          %v853 = vunpack.c.l.b16 %v692
          %v854 = vunpack.c.l.b16 %v693
          %v855 = vunpack.c.l.b16 %v694
          %v856 = vunpack.c.l.b16 %v695
          %v857 = vunpack.c.l.b16 %v696
          %v858 = vunpack.c.l.b16 %v697
          %v859 = vunpack.c.l.b16 %v698
          %v860 = vunpack.c.l.b16 %v699
          %v861 = vunpack.c.l.b16 %v700
          %v862 = vunpack.c.l.b16 %v701
          %v863 = vunpack.c.l.b16 %v702
          %v864 = vunpack.c.l.b16 %v703
          %v865 = vunpack.c.l.b16 %v704
          %v866 = vunpack.c.l.b16 %v705
          %v867 = vunpack.c.l.b16 %v706
          %v868 = vunpack.c.l.b16 %v707
          %v869 = vunpack.c.l.b16 %v708
          %v870 = vunpack.c.l.b16 %v709
          %v871 = vunpack.c.l.b16 %v710
          %v872 = vunpack.c.l.b16 %v711
          %v873 = vunpack.c.l.b16 %v712
          %v874 = vunpack.c.l.b16 %v713
          %v875 = vunpack.c.l.b16 %v714
          %v876 = vunpack.c.l.b16 %v715
          %v877 = vunpack.c.l.b16 %v716
          %v878 = vunpack.c.l.b16 %v717
          %v879 = vunpack.c.l.b16 %v718
          %v880 = vunpack.c.l.b16 %v719
          %v881 = vunpack.c.l.b16 %v720
          %v882 = vunpack.c.l.b16 %v721
          %v883 = vunpack.c.l.b16 %v722
          %v884 = vunpack.c.l.b16 %v723
          %v885 = vunpack.c.l.b16 %v724
          %v886 = vunpack.c.l.b16 %v725
          %v887 = vunpack.c.l.b16 %v726
          %v888 = vunpack.c.l.b16 %v727
          %v889 = vunpack.c.l.b16 %v728
          %v890 = vpack.c.b16 %v811, %v810
          %v891 = vpack.c.b16 %v813, %v812
          %v892 = vpack.c.b16 %v815, %v814
          %v893 = vpack.c.b16 %v817, %v816
          %v894 = vpack.c.b16 %v819, %v818
          %v895 = vpack.c.b16 %v821, %v820
          %v896 = vpack.c.b16 %v823, %v822
          %v897 = vpack.c.b16 %v825, %v824
          %v898 = vpack.c.b16 %v827, %v826
          %v899 = vpack.c.b16 %v829, %v828
          %v900 = vpack.c.b16 %v831, %v830
          %v901 = vpack.c.b16 %v833, %v832
          %v902 = vpack.c.b16 %v835, %v834
          %v903 = vpack.c.b16 %v837, %v836
          %v904 = vpack.c.b16 %v839, %v838
          %v905 = vpack.c.b16 %v841, %v840
          %v906 = vpack.c.b16 %v843, %v842
          %v907 = vpack.c.b16 %v845, %v844
          %v908 = vpack.c.b16 %v847, %v846
          %v909 = vpack.c.b16 %v849, %v848
          %v910 = vpack.c.b16 %v851, %v850
          %v911 = vpack.c.b16 %v853, %v852
          %v912 = vpack.c.b16 %v855, %v854
          %v913 = vpack.c.b16 %v857, %v856
          %v914 = vpack.c.b16 %v859, %v858
          %v915 = vpack.c.b16 %v861, %v860
          %v916 = vpack.c.b16 %v863, %v862
          %v917 = vpack.c.b16 %v865, %v864
          %v918 = vpack.c.b16 %v867, %v866
          %v919 = vpack.c.b16 %v869, %v868
          %v920 = vpack.c.b16 %v871, %v870
          %v921 = vpack.c.b16 %v873, %v872
          %v922 = vpack.c.b16 %v875, %v874
          %v923 = vpack.c.b16 %v877, %v876
          %v924 = vpack.c.b16 %v879, %v878
          %v925 = vpack.c.b16 %v881, %v880
          %v926 = vpack.c.b16 %v883, %v882
          %v927 = vpack.c.b16 %v885, %v884
          %v928 = vpack.c.b16 %v887, %v886
          %v929 = vpack.c.b16 %v889, %v888
          %970 = vmatprep.subr.bf16.mxu0 0
          %971 = vmatpush1.bf16.msra.mxu0 %v890
          %972 = vmatprep.subr.bf16.mxu0 0
          %973 = vmatpush1.bf16.msra.mxu0 %v891
          %974 = vmatprep.subr.bf16.mxu0 0
          %975 = vmatpush1.bf16.msra.mxu0 %v892
          %976 = vmatprep.subr.bf16.mxu0 0
          %977 = vmatpush1.bf16.msra.mxu0 %v893
          %978 = vmatprep.subr.bf16.mxu0 0
          %979 = vmatpush1.bf16.msra.mxu0 %v894
          %980 = vmatprep.subr.bf16.mxu0 0
          %981 = vmatpush1.bf16.msra.mxu0 %v895
          %982 = vmatprep.subr.bf16.mxu0 0
          %983 = vmatpush1.bf16.msra.mxu0 %v896
          %984 = vmatprep.subr.bf16.mxu0 0
          %985 = vmatpush1.bf16.msra.mxu0 %v897
          %986 = vmatprep.subr.bf16.mxu0 0
          %987 = vmatpush1.bf16.msra.mxu0 %v898
          %988 = vmatprep.subr.bf16.mxu0 0
          %989 = vmatpush1.bf16.msra.mxu0 %v899
          %990 = vmatprep.subr.bf16.mxu0 0
          %991 = vmatpush1.bf16.msra.mxu0 %v900
          %992 = vmatprep.subr.bf16.mxu0 0
          %993 = vmatpush1.bf16.msra.mxu0 %v901
          %994 = vmatprep.subr.bf16.mxu0 0
          %995 = vmatpush1.bf16.msra.mxu0 %v902
          %996 = vmatprep.subr.bf16.mxu0 0
          %997 = vmatpush1.bf16.msra.mxu0 %v903
          %998 = vmatprep.subr.bf16.mxu0 0
          %999 = vmatpush1.bf16.msra.mxu0 %v904
          %1000 = vmatprep.subr.bf16.mxu0 0
          %1001 = vmatpush1.bf16.msra.mxu0 %v905
          %1002 = vmatprep.mubr.bf16.mxu0 %v645
          %1003 = vmatmul.mubr.bf16.gmra.mrb[0].mxu0 %v644
          %v1004 = vpop.f32.mrb[0].mxu0
          %v1005 = vadd.f32 %v729, %v1004
          %v1006 = vpop.f32.mrb[0].mxu0
          %v1007 = vpop.f32.mrb[0].mxu0
          %v1008 = vpop.f32.mrb[0].mxu0
          %1009 = vdwg.mxu0
          %1010 = vmatprep.subr.bf16.mxu0 0
          %1011 = vmatpush1.bf16.msra.mxu0 %v906
          %1012 = vmatprep.subr.bf16.mxu0 0
          %1013 = vmatpush1.bf16.msra.mxu0 %v907
          %1014 = vmatprep.subr.bf16.mxu0 0
          %1015 = vmatpush1.bf16.msra.mxu0 %v908
          %1016 = vmatprep.subr.bf16.mxu0 0
          %1017 = vmatpush1.bf16.msra.mxu0 %v909
          %1018 = vmatprep.subr.bf16.mxu0 0
          %1019 = vmatpush1.bf16.msra.mxu0 %v910
          %1020 = vmatprep.subr.bf16.mxu0 0
          %1021 = vmatpush1.bf16.msra.mxu0 %v911
          %1022 = vmatprep.subr.bf16.mxu0 0
          %1023 = vmatpush1.bf16.msra.mxu0 %v912
          %1024 = vmatprep.subr.bf16.mxu0 0
          %1025 = vmatpush1.bf16.msra.mxu0 %v913
          %1026 = vmatprep.subr.bf16.mxu0 0
          %1027 = vmatpush1.bf16.msra.mxu0 %v914
          %1028 = vmatprep.subr.bf16.mxu0 0
          %1029 = vmatpush1.bf16.msra.mxu0 %v915
          %1030 = vmatprep.subr.bf16.mxu0 0
          %1031 = vmatpush1.bf16.msra.mxu0 %v916
          %1032 = vmatprep.subr.bf16.mxu0 0
          %1033 = vmatpush1.bf16.msra.mxu0 %v917
          %1034 = vmatprep.subr.bf16.mxu0 0
          %1035 = vmatpush1.bf16.msra.mxu0 %v918
          %1036 = vmatprep.subr.bf16.mxu0 0
          %1037 = vmatpush1.bf16.msra.mxu0 %v919
          %1038 = vmatprep.subr.bf16.mxu0 0
          %1039 = vmatpush1.bf16.msra.mxu0 %v920
          %1040 = vmatprep.subr.bf16.mxu0 0
          %1041 = vmatpush1.bf16.msra.mxu0 %v921
          %1042 = vmatprep.mubr.bf16.mxu0 %v647
          %1043 = vmatmul.mubr.bf16.gmra.mrb[0].mxu0 %v646
          %v1044 = vpop.f32.mrb[0].mxu0
          %v1045 = vadd.f32 %v1005, %v1044
          %v1046 = vpop.f32.mrb[0].mxu0
          %v1047 = vpop.f32.mrb[0].mxu0
          %v1048 = vpop.f32.mrb[0].mxu0
          %1049 = vdwg.mxu0
          %1050 = vmatprep.subr.bf16.mxu0 0
          %1051 = vmatpush1.bf16.msra.mxu0 %v922
          %1052 = vmatprep.subr.bf16.mxu0 0
          %1053 = vmatpush1.bf16.msra.mxu0 %v923
          %1054 = vmatprep.subr.bf16.mxu0 0
          %1055 = vmatpush1.bf16.msra.mxu0 %v924
          %1056 = vmatprep.subr.bf16.mxu0 0
          %1057 = vmatpush1.bf16.msra.mxu0 %v925
          %1058 = vmatprep.subr.bf16.mxu0 0
          %1059 = vmatpush1.bf16.msra.mxu0 %v926
          %1060 = vmatprep.subr.bf16.mxu0 0
          %1061 = vmatpush1.bf16.msra.mxu0 %v927
          %1062 = vmatprep.subr.bf16.mxu0 0
          %1063 = vmatpush1.bf16.msra.mxu0 %v928
          %1064 = vmatprep.subr.bf16.mxu0 0
          %1065 = vmatpush1.bf16.msra.mxu0 %v929
          %1066 = vmatprep.subr.bf16.mxu0 0
          %1067 = vmatpush1.bf16.msra.mxu0 0
          %1068 = vmatprep.subr.bf16.mxu0 0
          %1069 = vmatpush1.bf16.msra.mxu0 0
          %1070 = vmatprep.subr.bf16.mxu0 0
          %1071 = vmatpush1.bf16.msra.mxu0 0
          %1072 = vmatprep.subr.bf16.mxu0 0
          %1073 = vmatpush1.bf16.msra.mxu0 0
          %1074 = vmatprep.subr.bf16.mxu0 0
          %1075 = vmatpush1.bf16.msra.mxu0 0
          %1076 = vmatprep.subr.bf16.mxu0 0
          %1077 = vmatpush1.bf16.msra.mxu0 0
          %1078 = vmatprep.subr.bf16.mxu0 0
          %1079 = vmatpush1.bf16.msra.mxu0 0
          %1080 = vmatprep.subr.bf16.mxu0 0
          %1081 = vmatpush1.bf16.msra.mxu0 0
          %1082 = vmatprep.mubr.bf16.mxu0 0
          %1083 = vmatmul.mubr.bf16.gmra.mrb[0].mxu0 %v648
          %v1084 = vpop.f32.mrb[0].mxu0
          %v1085 = vadd.f32 %v1045, %v1084
          %v1086 = vpop.f32.mrb[0].mxu0
          %v1087 = vpop.f32.mrb[0].mxu0
          %v1088 = vpop.f32.mrb[0].mxu0
          %1089 = vdwg.mxu0
          %vm1090 = vcmask 261120
          %1091 = vst.msk [vmem:[#allocation2] sm:$0xff] %vm1090, %v1085
        $region104: #{crossview_forward.1} parent=59 // pred_fallthru
          _
        %v1092 = vld [vmem:[#allocation2] sm:$0xff]
        %v1093 = vld [vmem:[%s528] sm:$0xff]
        %v1094 = vld [vmem:[%s528 + $0x8] sm:$0x3]
        %vm1095 = vcmask 261120
        %v1096 = vsel %vm1095, %v1092, 0.0
        %1097 = vadd.xlane.f32.xlu0 %v1096
        %v1098 = vpop.xlane.xlu0 %1097
        %v1099 = vrcp.pop 32.0
        %v1100 = vmul.f32 %v1098, %v1099
        %v1101 = vsub.f32 %v1092, %v1100
        %v1102 = vmul.f32 %v1101, %v1101
        %v1103 = vsel %vm1095, %v1102, 0.0
        %1104 = vadd.xlane.f32.xlu0 %v1103
        %v1105 = vpop.xlane.xlu0 %1104
        %v1106 = vmul.f32 %v1105, %v1099
        %v1107 = vadd.f32 %v1106, 1e-06
        %v1108 = vrsqrt.pop %v1107
        %v1109 = vmul.f32 %v1101, %v1108
        %v1110 = vlaneseq
        %v1111 = vshrl.u32 %v1110, 7
        %v1112 = vsub.s32 0, %v1111
        %v1113 = vrot.slane %v1093, %v1112
        %v1114 = vmul.f32 %v1109, %v1113
        %v1115 = vlaneseq
        %v1116 = vshrl.u32 %v1115, 7
        %v1117 = vsub.s32 1, %v1116
        %v1118 = vrot.slane %v1093, %v1117
        %v1119 = vadd.f32 %v1114, %v1118
        %v1120 = vpack.c.bf16 %v1119, %v1119
        %v1121 = vld [vmem:[%s537] sm:$0xf]
        %v1122 = vld [vmem:[%s537 + $0x4] sm:$0xf]
        %v1123 = vld [vmem:[%s537 + $0x8] sm:$0xf]
        %v1124 = vld [vmem:[%s537 + $0xc] sm:$0xf]
        %v1125 = vlaneseq
        %v1126 = vshrl.u32 %v1125, 7
        %v1127 = vsub.s32 2, %v1126
        %v1128 = vrot.slane %v1093, %v1127
        %v1133 = vunpack.c.l.b16 %v1121
        %v1134 = vunpack.c.l.b16 %v1122
        %v1135 = vunpack.c.l.b16 %v1123
        %v1136 = vunpack.c.l.b16 %v1124
        %v1137 = vpack.c.b16 %v1134, %v1133
        %v1138 = vpack.c.b16 %v1136, %v1135
        %v1142 = vsel %vm1095, %v1120, 0
        %1144 = vmatprep.subr.bf16.mxu0 0
        %1145 = vmatpush1.bf16.msra.mxu0 %v1137
        %1146 = vmatprep.subr.bf16.mxu0 0
        %1147 = vmatpush1.bf16.msra.mxu0 %v1138
        %1148 = vmatprep.subr.bf16.mxu0 0
        %1149 = vmatpush1.bf16.msra.mxu0 0
        %1150 = vmatprep.subr.bf16.mxu0 0
        %1151 = vmatpush1.bf16.msra.mxu0 0
        %1152 = vmatprep.subr.bf16.mxu0 0
        %1153 = vmatpush1.bf16.msra.mxu0 0
        %1154 = vmatprep.subr.bf16.mxu0 0
        %1155 = vmatpush1.bf16.msra.mxu0 0
        %1156 = vmatprep.subr.bf16.mxu0 0
        %1157 = vmatpush1.bf16.msra.mxu0 0
        %1158 = vmatprep.subr.bf16.mxu0 0
        %1159 = vmatpush1.bf16.msra.mxu0 0
        %1160 = vmatprep.subr.bf16.mxu0 0
        %1161 = vmatpush1.bf16.msra.mxu0 0
        %1162 = vmatprep.subr.bf16.mxu0 0
        %1163 = vmatpush1.bf16.msra.mxu0 0
        %1164 = vmatprep.subr.bf16.mxu0 0
        %1165 = vmatpush1.bf16.msra.mxu0 0
        %1166 = vmatprep.subr.bf16.mxu0 0
        %1167 = vmatpush1.bf16.msra.mxu0 0
        %1168 = vmatprep.subr.bf16.mxu0 0
        %1169 = vmatpush1.bf16.msra.mxu0 0
        %1170 = vmatprep.subr.bf16.mxu0 0
        %1171 = vmatpush1.bf16.msra.mxu0 0
        %1172 = vmatprep.subr.bf16.mxu0 0
        %1173 = vmatpush1.bf16.msra.mxu0 0
        %1174 = vmatprep.subr.bf16.mxu0 0
        %1175 = vmatpush1.bf16.msra.mxu0 0
        %1176 = vmatprep.mubr.bf16.mxu0 0
        %1177 = vmatmul.mubr.bf16.gmra.mrb[0].mxu0 %v1142
        %v1178 = vpop.f32.mrb[0].mxu0
        %v1179 = vadd.f32 %v1128, %v1178
        %v1180 = vpop.f32.mrb[0].mxu0
        %v1181 = vpop.f32.mrb[0].mxu0
        %v1182 = vpop.f32.mrb[0].mxu0
        %1183 = vdwg.mxu0
        %v1184 = vlaneseq
        %v1185 = vand.u32 %v1184, 127
        %vm1186 = vcmp.lt.s32.totalorder %v1185, 5
        %v1187 = vsel %vm1186, 0.0, -1e+30
        %v1188 = vpack.c.bf16 %v1179, %v1179
        %1190 = vrot.lane.b32.xlu0 %v1188, 96
        %v1191 = vpop.permute.xlu0 %1190
        %vm1192 = vcmask 130048
        %v1194 = vsel %vm1192, %v1188, 0
        %v1197 = vsel %vm1192, %v1191, 0
        %1199 = vmatprep.subr.bf16.mxu0 0
        %1200 = vmatpush1.bf16.xpose.msra.mxu0 %v1197
        %1201 = vmatprep.subr.bf16.mxu0 0
        %1202 = vmatpush1.bf16.xpose.msra.mxu0 0
        %1203 = vmatprep.subr.bf16.mxu0 0
        %1204 = vmatpush1.bf16.xpose.msra.mxu0 0
        %1205 = vmatprep.subr.bf16.mxu0 0
        %1206 = vmatpush1.bf16.xpose.msra.mxu0 0
        %1207 = vmatprep.subr.bf16.mxu0 0
        %1208 = vmatpush1.bf16.xpose.msra.mxu0 0
        %1209 = vmatprep.subr.bf16.mxu0 0
        %1210 = vmatpush1.bf16.xpose.msra.mxu0 0
        %1211 = vmatprep.subr.bf16.mxu0 0
        %1212 = vmatpush1.bf16.xpose.msra.mxu0 0
        %1213 = vmatprep.subr.bf16.mxu0 0
        %1214 = vmatpush1.bf16.xpose.msra.mxu0 0
        %1215 = vmatprep.subr.bf16.mxu0 0
        %1216 = vmatpush1.bf16.xpose.msra.mxu0 0
        %1217 = vmatprep.subr.bf16.mxu0 0
        %1218 = vmatpush1.bf16.xpose.msra.mxu0 0
        %1219 = vmatprep.subr.bf16.mxu0 0
        %1220 = vmatpush1.bf16.xpose.msra.mxu0 0
        %1221 = vmatprep.subr.bf16.mxu0 0
        %1222 = vmatpush1.bf16.xpose.msra.mxu0 0
        %1223 = vmatprep.subr.bf16.mxu0 0
        %1224 = vmatpush1.bf16.xpose.msra.mxu0 0
        %1225 = vmatprep.subr.bf16.mxu0 0
        %1226 = vmatpush1.bf16.xpose.msra.mxu0 0
        %1227 = vmatprep.subr.bf16.mxu0 0
        %1228 = vmatpush1.bf16.xpose.msra.mxu0 0
        %1229 = vmatprep.subr.bf16.mxu0 0
        %1230 = vmatpush1.bf16.xpose.msra.mxu0 0
        %1231 = vmatprep.mubr.bf16.mxu0 0
        %1232 = vmatmul.mubr.bf16.gmra.mrb[0].mxu0 %v1194
        %v1233 = vpop.f32.mrb[0].mxu0
        %v1234 = vadd.f32 %v1187, %v1233
        %v1235 = vpop.f32.mrb[0].mxu0
        %v1236 = vpop.f32.mrb[0].mxu0
        %v1237 = vpop.f32.mrb[0].mxu0
        %1238 = vdwg.mxu0
        %vm1239 = vcmask 64512
        %v1240 = vsel %vm1239, %v1234, -inf
        %1241 = vmax.xlane.f32.xlu0 %v1240
        %v1242 = vpop.xlane.xlu0 %1241
        %v1243 = vsub.f32 %v1234, %v1242
        %v1244 = vmul.f32 %v1243, 1.442695
        %v1245 = vpow.pop %v1244
        %v1246 = vsel %vm1239, %v1245, 0.0
        %1247 = vadd.xlane.f32.xlu0 %v1246
        %v1248 = vpop.xlane.xlu0 %1247
        %v1249 = vrcp.pop %v1248
        %v1250 = vmul.f32 %v1245, %v1249
        %v1251 = vpack.c.bf16 %v1250, %v1250
        %1252 = vrot.lane.b32.xlu0 %v1188, 64
        %v1253 = vpop.permute.xlu0 %1252
        %v1255 = vsel %vm1239, %v1251, 0
        %vm1257 = vcmask 1043456
        %v1259 = vsel %vm1257, %v1253, 0
        %1261 = vmatprep.subr.bf16.mxu0 0
        %1262 = vmatpush1.bf16.msra.mxu0 %v1259
        %1263 = vmatprep.subr.bf16.mxu0 0
        %1264 = vmatpush1.bf16.msra.mxu0 0
        %1265 = vmatprep.subr.bf16.mxu0 0
        %1266 = vmatpush1.bf16.msra.mxu0 0
        %1267 = vmatprep.subr.bf16.mxu0 0
        %1268 = vmatpush1.bf16.msra.mxu0 0
        %1269 = vmatprep.subr.bf16.mxu0 0
        %1270 = vmatpush1.bf16.msra.mxu0 0
        %1271 = vmatprep.subr.bf16.mxu0 0
        %1272 = vmatpush1.bf16.msra.mxu0 0
        %1273 = vmatprep.subr.bf16.mxu0 0
        %1274 = vmatpush1.bf16.msra.mxu0 0
        %1275 = vmatprep.subr.bf16.mxu0 0
        %1276 = vmatpush1.bf16.msra.mxu0 0
        %1277 = vmatprep.subr.bf16.mxu0 0
        %1278 = vmatpush1.bf16.msra.mxu0 0
        %1279 = vmatprep.subr.bf16.mxu0 0
        %1280 = vmatpush1.bf16.msra.mxu0 0
        %1281 = vmatprep.subr.bf16.mxu0 0
        %1282 = vmatpush1.bf16.msra.mxu0 0
        %1283 = vmatprep.subr.bf16.mxu0 0
        %1284 = vmatpush1.bf16.msra.mxu0 0
        %1285 = vmatprep.subr.bf16.mxu0 0
        %1286 = vmatpush1.bf16.msra.mxu0 0
        %1287 = vmatprep.subr.bf16.mxu0 0
        %1288 = vmatpush1.bf16.msra.mxu0 0
        %1289 = vmatprep.subr.bf16.mxu0 0
        %1290 = vmatpush1.bf16.msra.mxu0 0
        %1291 = vmatprep.subr.bf16.mxu0 0
        %1292 = vmatpush1.bf16.msra.mxu0 0
        %1293 = vmatprep.mubr.bf16.mxu0 0
        %1294 = vmatmul.mubr.bf16.gmra.mrb[0].mxu0 %v1255
        %v1295 = vpop.f32.mrb[0].mxu0
        %v1296 = vadd.f32 0.0, %v1295
        %v1297 = vpop.f32.mrb[0].mxu0
        %v1298 = vpop.f32.mrb[0].mxu0
        %v1299 = vpop.f32.mrb[0].mxu0
        %1300 = vdwg.mxu0
        %1301 = vrot.lane.b32.xlu0 %v1188, 112
        %v1302 = vpop.permute.xlu0 %1301
        %1303 = vrot.lane.b32.xlu0 %v1188, 80
        %v1304 = vpop.permute.xlu0 %1303
        %v1306 = vsel %vm1192, %v1302, 0
        %v1309 = vsel %vm1192, %v1304, 0
        %1311 = vmatprep.subr.bf16.mxu0 0
        %1312 = vmatpush1.bf16.xpose.msra.mxu0 %v1309
        %1313 = vmatprep.subr.bf16.mxu0 0
        %1314 = vmatpush1.bf16.xpose.msra.mxu0 0
        %1315 = vmatprep.subr.bf16.mxu0 0
        %1316 = vmatpush1.bf16.xpose.msra.mxu0 0
        %1317 = vmatprep.subr.bf16.mxu0 0
        %1318 = vmatpush1.bf16.xpose.msra.mxu0 0
        %1319 = vmatprep.subr.bf16.mxu0 0
        %1320 = vmatpush1.bf16.xpose.msra.mxu0 0
        %1321 = vmatprep.subr.bf16.mxu0 0
        %1322 = vmatpush1.bf16.xpose.msra.mxu0 0
        %1323 = vmatprep.subr.bf16.mxu0 0
        %1324 = vmatpush1.bf16.xpose.msra.mxu0 0
        %1325 = vmatprep.subr.bf16.mxu0 0
        %1326 = vmatpush1.bf16.xpose.msra.mxu0 0
        %1327 = vmatprep.subr.bf16.mxu0 0
        %1328 = vmatpush1.bf16.xpose.msra.mxu0 0
        %1329 = vmatprep.subr.bf16.mxu0 0
        %1330 = vmatpush1.bf16.xpose.msra.mxu0 0
        %1331 = vmatprep.subr.bf16.mxu0 0
        %1332 = vmatpush1.bf16.xpose.msra.mxu0 0
        %1333 = vmatprep.subr.bf16.mxu0 0
        %1334 = vmatpush1.bf16.xpose.msra.mxu0 0
        %1335 = vmatprep.subr.bf16.mxu0 0
        %1336 = vmatpush1.bf16.xpose.msra.mxu0 0
        %1337 = vmatprep.subr.bf16.mxu0 0
        %1338 = vmatpush1.bf16.xpose.msra.mxu0 0
        %1339 = vmatprep.subr.bf16.mxu0 0
        %1340 = vmatpush1.bf16.xpose.msra.mxu0 0
        %1341 = vmatprep.subr.bf16.mxu0 0
        %1342 = vmatpush1.bf16.xpose.msra.mxu0 0
        %1343 = vmatprep.mubr.bf16.mxu0 0
        %1344 = vmatmul.mubr.bf16.gmra.mrb[0].mxu0 %v1306
        %v1345 = vpop.f32.mrb[0].mxu0
        %v1346 = vadd.f32 %v1187, %v1345
        %v1347 = vpop.f32.mrb[0].mxu0
        %v1348 = vpop.f32.mrb[0].mxu0
        %v1349 = vpop.f32.mrb[0].mxu0
        %1350 = vdwg.mxu0
        %v1351 = vsel %vm1239, %v1346, -inf
        %1352 = vmax.xlane.f32.xlu0 %v1351
        %v1353 = vpop.xlane.xlu0 %1352
        %v1354 = vsub.f32 %v1346, %v1353
        %v1355 = vmul.f32 %v1354, 1.442695
        %v1356 = vpow.pop %v1355
        %v1357 = vsel %vm1239, %v1356, 0.0
        %1358 = vadd.xlane.f32.xlu0 %v1357
        %v1359 = vpop.xlane.xlu0 %1358
        %v1360 = vrcp.pop %v1359
        %v1361 = vmul.f32 %v1356, %v1360
        %v1362 = vpack.c.bf16 %v1361, %v1361
        %1363 = vrot.lane.b32.xlu0 %v1188, 48
        %v1364 = vpop.permute.xlu0 %1363
        %v1366 = vsel %vm1239, %v1362, 0
        %v1369 = vsel %vm1257, %v1364, 0
        %1371 = vmatprep.subr.bf16.mxu0 0
        %1372 = vmatpush1.bf16.msra.mxu0 %v1369
        %1373 = vmatprep.subr.bf16.mxu0 0
        %1374 = vmatpush1.bf16.msra.mxu0 0
        %1375 = vmatprep.subr.bf16.mxu0 0
        %1376 = vmatpush1.bf16.msra.mxu0 0
        %1377 = vmatprep.subr.bf16.mxu0 0
        %1378 = vmatpush1.bf16.msra.mxu0 0
        %1379 = vmatprep.subr.bf16.mxu0 0
        %1380 = vmatpush1.bf16.msra.mxu0 0
        %1381 = vmatprep.subr.bf16.mxu0 0
        %1382 = vmatpush1.bf16.msra.mxu0 0
        %1383 = vmatprep.subr.bf16.mxu0 0
        %1384 = vmatpush1.bf16.msra.mxu0 0
        %1385 = vmatprep.subr.bf16.mxu0 0
        %1386 = vmatpush1.bf16.msra.mxu0 0
        %1387 = vmatprep.subr.bf16.mxu0 0
        %1388 = vmatpush1.bf16.msra.mxu0 0
        %1389 = vmatprep.subr.bf16.mxu0 0
        %1390 = vmatpush1.bf16.msra.mxu0 0
        %1391 = vmatprep.subr.bf16.mxu0 0
        %1392 = vmatpush1.bf16.msra.mxu0 0
        %1393 = vmatprep.subr.bf16.mxu0 0
        %1394 = vmatpush1.bf16.msra.mxu0 0
        %1395 = vmatprep.subr.bf16.mxu0 0
        %1396 = vmatpush1.bf16.msra.mxu0 0
        %1397 = vmatprep.subr.bf16.mxu0 0
        %1398 = vmatpush1.bf16.msra.mxu0 0
        %1399 = vmatprep.subr.bf16.mxu0 0
        %1400 = vmatpush1.bf16.msra.mxu0 0
        %1401 = vmatprep.subr.bf16.mxu0 0
        %1402 = vmatpush1.bf16.msra.mxu0 0
        %1403 = vmatprep.mubr.bf16.mxu0 0
        %1404 = vmatmul.mubr.bf16.gmra.mrb[0].mxu0 %v1366
        %v1405 = vpop.f32.mrb[0].mxu0
        %v1406 = vadd.f32 0.0, %v1405
        %v1407 = vpop.f32.mrb[0].mxu0
        %v1408 = vpop.f32.mrb[0].mxu0
        %v1409 = vpop.f32.mrb[0].mxu0
        %1410 = vdwg.mxu0
        %1412 = vrot.lane.b32.xlu0 %v1406, 16
        %v1413 = vpop.permute.xlu0 %1412
        %v1415 = vsel %vm1192, %v1296, %v1413
        %v1416 = vpack.c.bf16 %v1415, %v1415
        %v1417 = vld [vmem:[%s546] sm:$0xf]
        %v1418 = vld [vmem:[%s546 + $0x4] sm:$0xf]
        %v1419 = vld [vmem:[%s546 + $0x8] sm:$0xf]
        %v1420 = vld [vmem:[%s546 + $0xc] sm:$0xf]
        %v1421 = vlaneseq
        %v1422 = vshrl.u32 %v1421, 7
        %v1423 = vsub.s32 3, %v1422
        %v1424 = vrot.slane %v1093, %v1423
        %v1429 = vunpack.c.l.b16 %v1417
        %v1430 = vunpack.c.l.b16 %v1418
        %v1431 = vunpack.c.l.b16 %v1419
        %v1432 = vunpack.c.l.b16 %v1420
        %v1433 = vpack.c.b16 %v1430, %v1429
        %v1434 = vpack.c.b16 %v1432, %v1431
        %v1438 = vsel %vm1095, %v1416, 0
        %1440 = vmatprep.subr.bf16.mxu0 0
        %1441 = vmatpush1.bf16.msra.mxu0 %v1433
        %1442 = vmatprep.subr.bf16.mxu0 0
        %1443 = vmatpush1.bf16.msra.mxu0 %v1434
        %1444 = vmatprep.subr.bf16.mxu0 0
        %1445 = vmatpush1.bf16.msra.mxu0 0
        %1446 = vmatprep.subr.bf16.mxu0 0
        %1447 = vmatpush1.bf16.msra.mxu0 0
        %1448 = vmatprep.subr.bf16.mxu0 0
        %1449 = vmatpush1.bf16.msra.mxu0 0
        %1450 = vmatprep.subr.bf16.mxu0 0
        %1451 = vmatpush1.bf16.msra.mxu0 0
        %1452 = vmatprep.subr.bf16.mxu0 0
        %1453 = vmatpush1.bf16.msra.mxu0 0
        %1454 = vmatprep.subr.bf16.mxu0 0
        %1455 = vmatpush1.bf16.msra.mxu0 0
        %1456 = vmatprep.subr.bf16.mxu0 0
        %1457 = vmatpush1.bf16.msra.mxu0 0
        %1458 = vmatprep.subr.bf16.mxu0 0
        %1459 = vmatpush1.bf16.msra.mxu0 0
        %1460 = vmatprep.subr.bf16.mxu0 0
        %1461 = vmatpush1.bf16.msra.mxu0 0
        %1462 = vmatprep.subr.bf16.mxu0 0
        %1463 = vmatpush1.bf16.msra.mxu0 0
        %1464 = vmatprep.subr.bf16.mxu0 0
        %1465 = vmatpush1.bf16.msra.mxu0 0
        %1466 = vmatprep.subr.bf16.mxu0 0
        %1467 = vmatpush1.bf16.msra.mxu0 0
        %1468 = vmatprep.subr.bf16.mxu0 0
        %1469 = vmatpush1.bf16.msra.mxu0 0
        %1470 = vmatprep.subr.bf16.mxu0 0
        %1471 = vmatpush1.bf16.msra.mxu0 0
        %1472 = vmatprep.mubr.bf16.mxu0 0
        %1473 = vmatmul.mubr.bf16.gmra.mrb[0].mxu0 %v1438
        %v1474 = vpop.f32.mrb[0].mxu0
        %v1475 = vadd.f32 %v1424, %v1474
        %v1476 = vpop.f32.mrb[0].mxu0
        %v1477 = vpop.f32.mrb[0].mxu0
        %v1478 = vpop.f32.mrb[0].mxu0
        %1479 = vdwg.mxu0
        %v1480 = vlaneseq
        %v1481 = vshrl.u32 %v1480, 7
        %v1482 = vsub.s32 4, %v1481
        %v1483 = vrot.slane %v1093, %v1482
        %v1484 = vmul.f32 %v1483, %v1475
        %v1485 = vadd.f32 %v1092, %v1484
        %v1486 = vsel %vm1095, %v1485, 0.0
        %1487 = vadd.xlane.f32.xlu0 %v1486
        %v1488 = vpop.xlane.xlu0 %1487
        %v1489 = vmul.f32 %v1488, %v1099
        %v1490 = vsub.f32 %v1485, %v1489
        %v1491 = vmul.f32 %v1490, %v1490
        %v1492 = vsel %vm1095, %v1491, 0.0
        %1493 = vadd.xlane.f32.xlu0 %v1492
        %v1494 = vpop.xlane.xlu0 %1493
        %v1495 = vmul.f32 %v1494, %v1099
        %v1496 = vadd.f32 %v1495, 1e-06
        %v1497 = vrsqrt.pop %v1496
        %v1498 = vmul.f32 %v1490, %v1497
        %v1499 = vlaneseq
        %v1500 = vshrl.u32 %v1499, 7
        %v1501 = vsub.s32 5, %v1500
        %v1502 = vrot.slane %v1093, %v1501
        %v1503 = vmul.f32 %v1498, %v1502
        %v1504 = vlaneseq
        %v1505 = vshrl.u32 %v1504, 7
        %v1506 = vsub.s32 6, %v1505
        %v1507 = vrot.slane %v1093, %v1506
        %v1508 = vadd.f32 %v1503, %v1507
        %v1509 = vpack.c.bf16 %v1508, %v1508
        %v1510 = vld [vmem:[%s555] sm:$0xf]
        %v1511 = vld [vmem:[%s555 + $0x4] sm:$0xf]
        %v1512 = vld [vmem:[%s555 + $0x8] sm:$0xf]
        %v1513 = vld [vmem:[%s555 + $0xc] sm:$0xf]
        %v1514 = vlaneseq
        %v1515 = vshrl.u32 %v1514, 7
        %v1516 = vsub.s32 7, %v1515
        %v1517 = vrot.slane %v1093, %v1516
        %v1522 = vunpack.c.l.b16 %v1510
        %v1523 = vunpack.c.l.b16 %v1511
        %v1524 = vunpack.c.l.b16 %v1512
        %v1525 = vunpack.c.l.b16 %v1513
        %v1526 = vpack.c.b16 %v1523, %v1522
        %v1527 = vpack.c.b16 %v1525, %v1524
        %v1531 = vsel %vm1095, %v1509, 0
        %1533 = vmatprep.subr.bf16.mxu0 0
        %1534 = vmatpush1.bf16.msra.mxu0 %v1526
        %1535 = vmatprep.subr.bf16.mxu0 0
        %1536 = vmatpush1.bf16.msra.mxu0 %v1527
        %1537 = vmatprep.subr.bf16.mxu0 0
        %1538 = vmatpush1.bf16.msra.mxu0 0
        %1539 = vmatprep.subr.bf16.mxu0 0
        %1540 = vmatpush1.bf16.msra.mxu0 0
        %1541 = vmatprep.subr.bf16.mxu0 0
        %1542 = vmatpush1.bf16.msra.mxu0 0
        %1543 = vmatprep.subr.bf16.mxu0 0
        %1544 = vmatpush1.bf16.msra.mxu0 0
        %1545 = vmatprep.subr.bf16.mxu0 0
        %1546 = vmatpush1.bf16.msra.mxu0 0
        %1547 = vmatprep.subr.bf16.mxu0 0
        %1548 = vmatpush1.bf16.msra.mxu0 0
        %1549 = vmatprep.subr.bf16.mxu0 0
        %1550 = vmatpush1.bf16.msra.mxu0 0
        %1551 = vmatprep.subr.bf16.mxu0 0
        %1552 = vmatpush1.bf16.msra.mxu0 0
        %1553 = vmatprep.subr.bf16.mxu0 0
        %1554 = vmatpush1.bf16.msra.mxu0 0
        %1555 = vmatprep.subr.bf16.mxu0 0
        %1556 = vmatpush1.bf16.msra.mxu0 0
        %1557 = vmatprep.subr.bf16.mxu0 0
        %1558 = vmatpush1.bf16.msra.mxu0 0
        %1559 = vmatprep.subr.bf16.mxu0 0
        %1560 = vmatpush1.bf16.msra.mxu0 0
        %1561 = vmatprep.subr.bf16.mxu0 0
        %1562 = vmatpush1.bf16.msra.mxu0 0
        %1563 = vmatprep.subr.bf16.mxu0 0
        %1564 = vmatpush1.bf16.msra.mxu0 0
        %1565 = vmatprep.mubr.bf16.mxu0 0
        %1566 = vmatmul.mubr.bf16.gmra.mrb[0].mxu0 %v1531
        %v1567 = vpop.f32.mrb[0].mxu0
        %v1568 = vadd.f32 %v1517, %v1567
        %v1569 = vpop.f32.mrb[0].mxu0
        %v1570 = vpop.f32.mrb[0].mxu0
        %v1571 = vpop.f32.mrb[0].mxu0
        %1572 = vdwg.mxu0
        %v1573 = vmul.f32 %v1568, 0.5
        %v1574 = vmul.f32 %v1568, 0.70710677
        %v1575 = vand.u32 2147483647, %v1574
        %v1576 = vmul.f32 %v1575, 0.3275911
        %v1577 = vadd.f32 %v1576, 1.0
        %v1578 = vrcp.pop %v1577
        %v1579 = vmul.f32 %v1578, 1.0614054
        %v1580 = vadd.f32 %v1579, -1.4531521
        %v1581 = vmul.f32 %v1580, %v1578
        %v1582 = vadd.f32 %v1581, 1.4214138
        %v1583 = vmul.f32 %v1582, %v1578
        %v1584 = vadd.f32 %v1583, -0.28449672
        %v1585 = vmul.f32 %v1584, %v1578
        %v1586 = vadd.f32 %v1585, 0.2548296
        %v1587 = vmul.f32 %v1586, %v1578
        %v1588 = vsub.f32 0.0, %v1575
        %v1589 = vmul.f32 %v1588, %v1575
        %v1590 = vmul.f32 %v1589, 1.442695
        %v1591 = vpow.pop %v1590
        %v1592 = vmul.f32 %v1587, %v1591
        %v1593 = vsub.f32 1.0, %v1592
        %vm1594 = vcmp.ge.f32.partialorder %v1574, 0.0
        %v1595 = vsub.f32 0.0, %v1593
        %v1596 = vsel %vm1594, %v1593, %v1595
        %v1597 = vadd.f32 %v1596, 1.0
        %v1598 = vmul.f32 %v1573, %v1597
        %v1599 = vpack.c.bf16 %v1598, %v1598
        %v1600 = vld [vmem:[%s564] sm:$0xf]
        %v1601 = vld [vmem:[%s564 + $0x4] sm:$0xf]
        %v1602 = vld [vmem:[%s564 + $0x8] sm:$0xf]
        %v1603 = vld [vmem:[%s564 + $0xc] sm:$0xf]
        %v1604 = vld [vmem:[%s564 + $0x10] sm:$0xf]
        %v1605 = vld [vmem:[%s564 + $0x14] sm:$0xf]
        %v1606 = vld [vmem:[%s564 + $0x18] sm:$0xf]
        %v1607 = vld [vmem:[%s564 + $0x1c] sm:$0xf]
        %v1608 = vld [vmem:[%s564 + $0x20] sm:$0xf]
        %v1609 = vld [vmem:[%s564 + $0x24] sm:$0xf]
        %v1610 = vld [vmem:[%s564 + $0x28] sm:$0xf]
        %v1611 = vld [vmem:[%s564 + $0x2c] sm:$0xf]
        %v1612 = vld [vmem:[%s564 + $0x30] sm:$0xf]
        %v1613 = vld [vmem:[%s564 + $0x34] sm:$0xf]
        %v1614 = vld [vmem:[%s564 + $0x38] sm:$0xf]
        %v1615 = vld [vmem:[%s564 + $0x3c] sm:$0xf]
        %v1616 = vlaneseq
        %v1617 = vshrl.u32 %v1616, 7
        %v1618 = vsub.s32 0, %v1617
        %v1619 = vrot.slane %v1094, %v1618
        %v1636 = vunpack.c.l.b16 %v1600
        %v1637 = vunpack.c.l.b16 %v1601
        %v1638 = vunpack.c.l.b16 %v1602
        %v1639 = vunpack.c.l.b16 %v1603
        %v1640 = vunpack.c.l.b16 %v1604
        %v1641 = vunpack.c.l.b16 %v1605
        %v1642 = vunpack.c.l.b16 %v1606
        %v1643 = vunpack.c.l.b16 %v1607
        %v1644 = vunpack.c.l.b16 %v1608
        %v1645 = vunpack.c.l.b16 %v1609
        %v1646 = vunpack.c.l.b16 %v1610
        %v1647 = vunpack.c.l.b16 %v1611
        %v1648 = vunpack.c.l.b16 %v1612
        %v1649 = vunpack.c.l.b16 %v1613
        %v1650 = vunpack.c.l.b16 %v1614
        %v1651 = vunpack.c.l.b16 %v1615
        %v1652 = vpack.c.b16 %v1637, %v1636
        %v1653 = vpack.c.b16 %v1639, %v1638
        %v1654 = vpack.c.b16 %v1641, %v1640
        %v1655 = vpack.c.b16 %v1643, %v1642
        %v1656 = vpack.c.b16 %v1645, %v1644
        %v1657 = vpack.c.b16 %v1647, %v1646
        %v1658 = vpack.c.b16 %v1649, %v1648
        %v1659 = vpack.c.b16 %v1651, %v1650
        %1668 = vmatprep.subr.bf16.mxu0 0
        %1669 = vmatpush1.bf16.msra.mxu0 %v1652
        %1670 = vmatprep.subr.bf16.mxu0 0
        %1671 = vmatpush1.bf16.msra.mxu0 %v1653
        %1672 = vmatprep.subr.bf16.mxu0 0
        %1673 = vmatpush1.bf16.msra.mxu0 %v1654
        %1674 = vmatprep.subr.bf16.mxu0 0
        %1675 = vmatpush1.bf16.msra.mxu0 %v1655
        %1676 = vmatprep.subr.bf16.mxu0 0
        %1677 = vmatpush1.bf16.msra.mxu0 %v1656
        %1678 = vmatprep.subr.bf16.mxu0 0
        %1679 = vmatpush1.bf16.msra.mxu0 %v1657
        %1680 = vmatprep.subr.bf16.mxu0 0
        %1681 = vmatpush1.bf16.msra.mxu0 %v1658
        %1682 = vmatprep.subr.bf16.mxu0 0
        %1683 = vmatpush1.bf16.msra.mxu0 %v1659
        %1684 = vmatprep.subr.bf16.mxu0 0
        %1685 = vmatpush1.bf16.msra.mxu0 0
        %1686 = vmatprep.subr.bf16.mxu0 0
        %1687 = vmatpush1.bf16.msra.mxu0 0
        %1688 = vmatprep.subr.bf16.mxu0 0
        %1689 = vmatpush1.bf16.msra.mxu0 0
        %1690 = vmatprep.subr.bf16.mxu0 0
        %1691 = vmatpush1.bf16.msra.mxu0 0
        %1692 = vmatprep.subr.bf16.mxu0 0
        %1693 = vmatpush1.bf16.msra.mxu0 0
        %1694 = vmatprep.subr.bf16.mxu0 0
        %1695 = vmatpush1.bf16.msra.mxu0 0
        %1696 = vmatprep.subr.bf16.mxu0 0
        %1697 = vmatpush1.bf16.msra.mxu0 0
        %1698 = vmatprep.subr.bf16.mxu0 0
        %1699 = vmatpush1.bf16.msra.mxu0 0
        %1700 = vmatprep.mubr.bf16.mxu0 0
        %1701 = vmatmul.mubr.bf16.gmra.mrb[0].mxu0 %v1599
        %v1702 = vpop.f32.mrb[0].mxu0
        %v1703 = vadd.f32 %v1619, %v1702
        %v1704 = vpop.f32.mrb[0].mxu0
        %v1705 = vpop.f32.mrb[0].mxu0
        %v1706 = vpop.f32.mrb[0].mxu0
        %1707 = vdwg.mxu0
        %v1708 = vlaneseq
        %v1709 = vshrl.u32 %v1708, 7
        %v1710 = vsub.s32 1, %v1709
        %v1711 = vrot.slane %v1094, %v1710
        %v1712 = vmul.f32 %v1711, %v1703
        %v1713 = vadd.f32 %v1485, %v1712
        %1714 = vst.msk [vmem:[#allocation2] sm:$0xff] %vm1095, %v1713
        %p1715 = scmp.eq.s32.totalorder %s43, 1
        // Predicated region
        $region105: #{crossview_forward.1} parent=59 // pred_check
          %p1716 = pneg %p1715
        $region106: #{crossview_forward.1} parent=59 // pred_check_branch
          %1718 = sbr.rel (%p1716) target = $region108
        $region107: #{crossview_forward.1} parent=59 // pred_region
          %v1719 = vld [vmem:[#allocation17] sm:$0x1]
          %v1720 = vld [vmem:[#allocation18] sm:$0x1]
          %v1721 = vsel %vm1095, %v1713, 0.0
          %1722 = vadd.xlane.f32.xlu0 %v1721
          %v1723 = vpop.xlane.xlu0 %1722
          %v1724 = vmul.f32 %v1723, %v1099
          %v1725 = vsub.f32 %v1713, %v1724
          %v1726 = vmul.f32 %v1725, %v1725
          %v1727 = vsel %vm1095, %v1726, 0.0
          %1728 = vadd.xlane.f32.xlu0 %v1727
          %v1729 = vpop.xlane.xlu0 %1728
          %v1730 = vmul.f32 %v1729, %v1099
          %v1731 = vadd.f32 %v1730, 1e-06
          %v1732 = vrsqrt.pop %v1731
          %v1733 = vmul.f32 %v1725, %v1732
          %v1735 = vlaneseq
          %v1736 = vshrl.u32 %v1735, 7
          %v1737 = vsub.s32 0, %v1736
          %v1738 = vrot.slane %v1719, %v1737
          %v1740 = vmul.f32 %v1733, %v1738
          %v1742 = vlaneseq
          %v1743 = vshrl.u32 %v1742, 7
          %v1744 = vsub.s32 0, %v1743
          %v1745 = vrot.slane %v1720, %v1744
          %v1747 = vadd.f32 %v1740, %v1745
          %1748 = vst.msk [vmem:[%s633] sm:$0xff] %vm1095, %v1747
        $region108: #{crossview_forward.1} parent=59 // pred_fallthru
          _
        %s1749 = sand.u32 %s298, 1
        %s1750 = scalar_lea.sflag [#allocation5], %s1749
        %s1751 = sand.u32 %s298, 1
        %s1752 = smul.addr %s1751, 8
        %s1753 = scalar_lea.vmem [#allocation20], %s1752
        // Predicated region
        $region109: #{crossview_forward.1} parent=59 // pred_check
          %p1754 = pneg %p308
        $region110: #{crossview_forward.1} parent=59 // pred_check_branch
          %1756 = sbr.rel (%p1754) target = $region112
        $region111: #{crossview_forward.1} parent=59 // pred_region
          %s1758 = ssub.s32 128, 128
          %1759 = vsyncadd %s1750, %s1758
          %s1760 = smul.addr %s42, 128
          %s1761 = scalar_lea.hbm %s10, %s1760
          %s1763 = sshll.u32 %s1753, 4
          %s1764 = int_to_ptr.vmem [resolvable:$true] %s1763
          %1766 = dma.vmem_to_hbm [thread:$0]  %s1764, 128, %s1761, %s1750
        $region112: #{crossview_forward.1} parent=59 // pred_fallthru
          _
      $region60: #{crossview_forward.1} parent=5 // pred_fallthru
        _
      %p1767 = scmp.le.s32.totalorder 2, %s33
      // Predicated region
      $region113: #{crossview_forward.1} parent=5 // pred_check
        %p1768 = pneg %p1767
      $region114: #{crossview_forward.1} parent=5 // pred_check_branch
        %1770 = sbr.rel (%p1768) target = $region116
      $region115: #{crossview_forward.1} parent=5 // pred_region
        %s1771 = ssub.s32 %s33, 2
        // Predicated region
        $region117: #{crossview_forward.1} parent=115 // pred_check
          %p1772 = pneg %p314
        $region118: #{crossview_forward.1} parent=115 // pred_check_branch
          %1774 = sbr.rel (%p1772) target = $region120
        $region119: #{crossview_forward.1} parent=115 // pred_region
          %s1775 = sand.u32 %s299, 1
          %s1776 = scalar_lea.sflag [#allocation5], %s1775
          %s1777 = sand.u32 %s299, 1
          %s1778 = smul.addr %s1777, 8
          %s1779 = scalar_lea.vmem [#allocation20], %s1778
          %1780 = dma.done %s1776, 128
        $region120: #{crossview_forward.1} parent=115 // pred_fallthru
          _
      $region116: #{crossview_forward.1} parent=5 // pred_fallthru
        _
    $region6: #{crossview_forward.1} parent=1 // loop_footer
      %s37 = sadd.s32 1, %s33
    $region7: #{crossview_forward.1} parent=1 // loop_footer_branch
      %32 = sbr.rel target = $region3
    $region8: #{crossview_forward.1} parent=1 // loop_exit
      _
    %1781 = vsyncpa [#allocation4], 1
    %s1782 = scalar_lea.sflag [#allocation4], 1
    %1783 = vsyncpa %s1782, 1
    %1784 = vsyncpa [#allocation7], 1
    %1785 = vsyncpa [#allocation10], 1
    %s1786 = scalar_lea.sflag [#allocation10], 1
    %1787 = vsyncpa %s1786, 1
    %1788 = vsyncpa [#allocation13], 1
    %s1789 = scalar_lea.sflag [#allocation13], 1
    %1790 = vsyncpa %s1789, 1
    %1791 = vsyncpa [#allocation16], 1
    %s1792 = scalar_lea.sflag [#allocation16], 1
    %1793 = vsyncpa %s1792, 1
    %1794 = vsyncpa [#allocation19], 1
    %1795 = vsyncpa [#allocation5], 1
    %s1796 = scalar_lea.sflag [#allocation5], 1
    %1797 = vsyncpa %s1796, 1

</llo_original>
